<compile_context>
chip_gen: v5e
topology: v5e:2x2
jax: 0.10.0
libtpu: 0.0.40
codegen_flags: <defaults>
</compile_context>

<pallas_src>
import math
import functools

import jax
import jax.numpy as jnp
from jax import lax
from jax.experimental import pallas as pl
from jax.experimental.pallas import tpu as pltpu  # noqa: F401  (TPU backend)

# ------------------------- model config (small) ------------------------------
DIM = 32          # args.dim
N_HEADS = 4       # args.n_heads
HEAD_DIM = DIM // N_HEADS
N_LAYERS = 2      # args.n_layers
MULTIPLE_OF = 16  # args.multiple_of
NORM_EPS = 1e-5   # args.norm_eps
VOCAB = 64        # args.vocab_size
BSZ = 2
SEQ = 8
THETA = 10000.0


def _ffn_hidden(dim: int, multiple_of: int) -> int:
    hidden = 4 * dim
    hidden = int(2 * hidden / 3)
    return multiple_of * ((hidden + multiple_of - 1) // multiple_of)


HIDDEN = _ffn_hidden(DIM, MULTIPLE_OF)  # 96 for dim=32, multiple_of=16


# ------------------------------ kernel ---------------------------------------
def _rmsnorm(x, w2d, eps):
    # x: (R, D) f32, w2d: (1, D) f32
    ms = jnp.mean(x * x, axis=-1, keepdims=True)
    return x * lax.rsqrt(ms + eps) * w2d


def fused_forward_kernel(x_ref, q_ref, cos_ref, sin_ref, hmask_ref,
                         anorm_ref, fnorm_ref,
                         wkv_ref, wo_ref, w13_ref, w2_ref,
                         onorm_ref, wout_ref,
                         out_ref, *,
                         n_layers, bsz, seq, n_heads, head_dim, hidden, eps):
    """Whole BERTTransformer_cross forward, one program, everything in VMEM."""
    D = n_heads * head_dim
    R = bsz * seq

    def bdot(a, b_bf16):
        # single-pass bf16 MXU matmul, f32 accumulation
        return jnp.dot(a.astype(jnp.bfloat16), b_bf16,
                       preferred_element_type=jnp.float32)

    h = x_ref[...]                         # (R, D) f32 residual stream
    cos = cos_ref[...]                     # (R, D) f32
    sin = sin_ref[...]                     # (R, D) f32 (sign baked in)
    hmask = hmask_ref[...]                 # (H*S, D) f32 block-diag head mask

    for l in range(n_layers):              # static unrolled loop (L=2)
        # ---------------- attention (cross: q comes pre-rotated, pre-scaled) --
        xn = _rmsnorm(h, anorm_ref[l], eps)                       # (R, D)
        kv = bdot(xn, wkv_ref[l])                                 # (R, 3D) f32
        # elementwise RoPE on K: swap already folded into the weights
        xk = kv[:, :D] * cos + kv[:, D:2 * D] * sin               # (R, D)
        xv = kv[:, 2 * D:]                                        # (R, D)

        k3 = xk.reshape(bsz, seq, D).astype(jnp.bfloat16)         # (B, S, D)
        v3 = xv.reshape(bsz, seq, D).astype(jnp.bfloat16)         # (B, S, D)
        q3 = q_ref[l]                                             # (B, H*S, D) bf16

        # scores: head-block-diagonal q means the full-D contraction only picks
        # up head-h lanes for rows h*S+q.
        s = jnp.einsum('bqd,bkd->bqk', q3, k3,
                       preferred_element_type=jnp.float32)        # (B, H*S, S)
        s = s - jnp.max(s, axis=-1, keepdims=True)
        p = jnp.exp(s)
        p = p * pl.reciprocal(jnp.sum(p, axis=-1, keepdims=True), approx=True)

        o3 = jnp.einsum('bqk,bkd->bqd', p.astype(jnp.bfloat16), v3,
                        preferred_element_type=jnp.float32)       # (B, H*S, D)
        o3 = o3 * hmask                                           # keep own-head lanes

        # head re-merge: sum the H row-blocks (distinct lanes per head).
        attn = o3[:, 0:seq, :]
        for hh in range(1, n_heads):
            attn = attn + o3[:, hh * seq:(hh + 1) * seq, :]       # (B, S, D)
        attn = attn.reshape(R, D)

        h = h + bdot(attn, wo_ref[l])

        # ---------------- feed forward (SwiGLU, fused w1|w3) ------------------
        hn = _rmsnorm(h, fnorm_ref[l], eps)
        a13 = bdot(hn, w13_ref[l])                                # (R, 2*Hd)
        a = a13[:, :hidden]
        c = a13[:, hidden:]
        silu = a * pl.reciprocal(1.0 + jnp.exp(-a), approx=True)
        h = h + bdot(silu * c, w2_ref[l])

    # ---------------- final RMSNorm + output projection -----------------------
    hn = _rmsnorm(h, onorm_ref[...], eps)
    out_ref[...] = bdot(hn, wout_ref[...]).astype(out_ref.dtype)


# ------------------------------ wrapper ---------------------------------------
def rope_angles(head_dim, start_pos, seqlen, theta=THETA):
    freqs = 1.0 / theta ** (
        jnp.arange(0, head_dim, 2)[: head_dim // 2].astype(jnp.float32) / head_dim)
    t = jnp.arange(start_pos, start_pos + seqlen).astype(jnp.float32)
    return jnp.outer(t, freqs)  # (S, hd/2)


def forward_pallas(tokens, shared_q, params, final, start_pos):
    B, S, D = tokens.shape
    L, H, hd, Hd = N_LAYERS, N_HEADS, HEAD_DIM, HIDDEN
    V = final["wout"].shape[1]
    scale = 1.0 / math.sqrt(hd)

    ang = rope_angles(hd, start_pos, S)                     # (S, hd/2)
    cos_h = jnp.cos(ang)
    sin_h = jnp.sin(ang)

    # ---- q: RoPE + 1/sqrt(hd) scale, laid out head-block-diagonal (L,B,H*S,D) ----
    xq = shared_q.astype(jnp.float32)                       # (L, B, H, S, hd)
    xqr = xq.reshape(L, B, H, S, hd // 2, 2)
    re = xqr[..., 0] * cos_h - xqr[..., 1] * sin_h
    im = xqr[..., 0] * sin_h + xqr[..., 1] * cos_h
    q_rot = jnp.stack([re, im], axis=-1).reshape(L, B, H, S, hd) * scale
    eye = jnp.eye(H, dtype=jnp.float32)
    q_full = q_rot[:, :, :, :, None, :] * eye[None, None, :, None, :, None]
    q_full = q_full.reshape(L, B, H * S, H * hd).astype(jnp.bfloat16)  # lane-dense

    # ---- k-side elementwise RoPE tables (B*S, D); +/- sign baked into sin ----
    cos_full = jnp.tile(jnp.repeat(cos_h, 2, axis=1), (B, H))               # (B*S, D)
    sin_full = jnp.tile(jnp.stack([-sin_h, sin_h], axis=-1).reshape(S, hd), (B, H))

    # ---- block-diagonal head mask (H*S, D): 1 on own-head lanes ----
    hmask = jnp.kron(eye, jnp.ones((S, hd), jnp.float32))                   # (32, 32)

    # ---- stack / fuse per-layer weights (swap folded into wk columns) ----
    perm = jnp.arange(D).reshape(-1, 2)[:, ::-1].reshape(-1)   # pair-swap column perm
    wkv = jnp.stack([jnp.concatenate([p["wk"], p["wk"][:, perm], p["wv"]], axis=1)
                     for p in params]).astype(jnp.bfloat16)                 # (L, D, 3D)
    wo = jnp.stack([p["wo"] for p in params]).astype(jnp.bfloat16)          # (L, D, D)
    w13 = jnp.stack([jnp.concatenate([p["w1"], p["w3"]], axis=1)
                     for p in params]).astype(jnp.bfloat16)                 # (L, D, 2Hd)
    w2 = jnp.stack([p["w2"] for p in params]).astype(jnp.bfloat16)          # (L, Hd, D)
    anorm = jnp.stack([p["attn_norm"] for p in params])                     # (L, 1, D) f32
    fnorm = jnp.stack([p["ffn_norm"] for p in params])                      # (L, 1, D) f32
    wout = final["wout"].astype(jnp.bfloat16)                               # (D, V)

    x2d = tokens.reshape(B * S, D)

    kernel = functools.partial(
        fused_forward_kernel, n_layers=L, bsz=B, seq=S,
        n_heads=H, head_dim=hd, hidden=Hd, eps=NORM_EPS)

    # Single program, no grid: everything is a full-array VMEM block (~200 KB).
    out = pl.pallas_call(
        kernel,
        out_shape=jax.ShapeDtypeStruct((B * S, V), jnp.float32),
    )(x2d, q_full, cos_full, sin_full, hmask,
      anorm, fnorm, wkv, wo, w13, w2,
      final["norm"], wout)
    return out.reshape(B, S, V)


# --------------------------- parameters & reference ---------------------------
def init_params(key):
    params = []
    for _ in range(N_LAYERS):
        key, *ks = jax.random.split(key, 9)
        params.append({
            "wk": 0.05 * jax.random.normal(ks[0], (DIM, DIM), jnp.float32),
            "wv": 0.05 * jax.random.normal(ks[1], (DIM, DIM), jnp.float32),
            "wo": 0.05 * jax.random.normal(ks[2], (DIM, DIM), jnp.float32),
            "w1": 0.05 * jax.random.normal(ks[3], (DIM, HIDDEN), jnp.float32),
            "w2": 0.05 * jax.random.normal(ks[4], (HIDDEN, DIM), jnp.float32),
            "w3": 0.05 * jax.random.normal(ks[5], (DIM, HIDDEN), jnp.float32),
            "attn_norm": 1.0 + 0.1 * jax.random.normal(ks[6], (1, DIM), jnp.float32),
            "ffn_norm": 1.0 + 0.1 * jax.random.normal(ks[7], (1, DIM), jnp.float32),
        })
    key, k1, k2 = jax.random.split(key, 3)
    final = {
        "norm": 1.0 + 0.1 * jax.random.normal(k1, (1, DIM), jnp.float32),
        "wout": 0.05 * jax.random.normal(k2, (DIM, VOCAB), jnp.float32),
    }
    return params, final


def ref_forward(tokens, shared_q, params, final, start_pos):
    """Pure-JAX reference mirroring the PyTorch forward exactly (f32 matmuls)."""
    B, S, D = tokens.shape
    H, hd = N_HEADS, HEAD_DIM
    ang = rope_angles(hd, start_pos, S)
    fcis = lax.complex(jnp.cos(ang), jnp.sin(ang))  # (S, hd/2)

    def rms(x, w):
        ms = jnp.mean(x * x, axis=-1, keepdims=True)
        return x * lax.rsqrt(ms + NORM_EPS) * w[0]

    def rope(x):  # x: (B, S, H, hd)
        xr = x.reshape(B, S, H, hd // 2, 2)
        xc = lax.complex(xr[..., 0], xr[..., 1])
        xo = xc * fcis[None, :, None, :]
        return jnp.stack([jnp.real(xo), jnp.imag(xo)], axis=-1).reshape(B, S, H, hd)

    with jax.default_matmul_precision("highest"):
        h = tokens
        for l, p in enumerate(params):
            xn = rms(h, p["attn_norm"])
            xk = (xn @ p["wk"]).reshape(B, S, H, hd)
            xv = (xn @ p["wv"]).reshape(B, S, H, hd)
            xq = jnp.transpose(shared_q[l], (0, 2, 1, 3))  # (B, S, H, hd)
            xq = rope(xq)
            xk = rope(xk)
            q = jnp.transpose(xq, (0, 2, 1, 3))
            k = jnp.transpose(xk, (0, 2, 1, 3))
            v = jnp.transpose(xv, (0, 2, 1, 3))
            scores = jnp.einsum("bhqd,bhkd->bhqk", q, k) / math.sqrt(hd)
            scores = jax.nn.softmax(scores, axis=-1)
            o = jnp.einsum("bhqk,bhkd->bhqd", scores, v)
            o = jnp.transpose(o, (0, 2, 1, 3)).reshape(B, S, D) @ p["wo"]
            h = h + o
            hn = rms(h, p["ffn_norm"])
            h = h + (jax.nn.silu(hn @ p["w1"]) * (hn @ p["w3"])) @ p["w2"]
        h = rms(h, final["norm"])
        return h @ final["wout"]


# ----------------------------------- main --------------------------------------
if __name__ == "__main__":
    key = jax.random.PRNGKey(0)
    kt, kq, kp = jax.random.split(key, 3)
    tokens = jax.random.normal(kt, (BSZ, SEQ, DIM), jnp.float32)
    shared_q = jax.random.normal(kq, (N_LAYERS, BSZ, N_HEADS, SEQ, HEAD_DIM), jnp.float32)
    params, final = init_params(kp)
    start_pos = 0

    out = forward_pallas(tokens, shared_q, params, final, start_pos)
    out = jax.block_until_ready(out)

    ref = ref_forward(tokens, shared_q, params, final, start_pos)
    ref = jax.block_until_ready(ref)

    assert out.shape == (BSZ, SEQ, VOCAB), out.shape
    max_err = float(jnp.max(jnp.abs(out - ref)))
    assert max_err < 1e-2, f"mismatch vs reference: max abs err {max_err}"
    print("KERNEL_OK")
</pallas_src>

<mosaic_0001>
module attributes {stable_mosaic.version = 11 : i64} {
  func.func @fused_forward_kernel(%arg0: memref<16x32xf32, #tpu.memory_space<vmem>>, %arg1: memref<2x2x32x32xbf16, #tpu.memory_space<vmem>>, %arg2: memref<16x32xf32, #tpu.memory_space<vmem>>, %arg3: memref<16x32xf32, #tpu.memory_space<vmem>>, %arg4: memref<32x32xf32, #tpu.memory_space<vmem>>, %arg5: memref<2x1x32xf32, #tpu.memory_space<vmem>>, %arg6: memref<2x1x32xf32, #tpu.memory_space<vmem>>, %arg7: memref<2x32x96xbf16, #tpu.memory_space<vmem>>, %arg8: memref<2x32x32xbf16, #tpu.memory_space<vmem>>, %arg9: memref<2x32x192xbf16, #tpu.memory_space<vmem>>, %arg10: memref<2x96x32xbf16, #tpu.memory_space<vmem>>, %arg11: memref<1x32xf32, #tpu.memory_space<vmem>>, %arg12: memref<32x64xbf16, #tpu.memory_space<vmem>>, %arg13: memref<16x64xf32, #tpu.memory_space<vmem>>) attributes {dimension_semantics = [], scalar_prefetch = 0 : i64, scratch_operands = 0 : i64, tpu.core_type = #tpu.core_type<tc>} {
    %c0 = arith.constant 0 : index
    %c0_0 = arith.constant 0 : index
    %0 = vector.load %arg0[%c0, %c0_0] : memref<16x32xf32, #tpu.memory_space<vmem>>, vector<16x32xf32>
    %c0_1 = arith.constant 0 : index
    %c0_2 = arith.constant 0 : index
    %1 = vector.load %arg2[%c0_1, %c0_2] : memref<16x32xf32, #tpu.memory_space<vmem>>, vector<16x32xf32>
    %c0_3 = arith.constant 0 : index
    %c0_4 = arith.constant 0 : index
    %2 = vector.load %arg3[%c0_3, %c0_4] : memref<16x32xf32, #tpu.memory_space<vmem>>, vector<16x32xf32>
    %c0_5 = arith.constant 0 : index
    %c0_6 = arith.constant 0 : index
    %3 = vector.load %arg4[%c0_5, %c0_6] : memref<32x32xf32, #tpu.memory_space<vmem>>, vector<32x32xf32>
    %c0_7 = arith.constant 0 : index
    %c0_8 = arith.constant 0 : index
    %c0_9 = arith.constant 0 : index
    %4 = vector.load %arg5[%c0_7, %c0_8, %c0_9] : memref<2x1x32xf32, #tpu.memory_space<vmem>>, vector<1x1x32xf32>
    %5 = vector.shape_cast %4 : vector<1x1x32xf32> to vector<1x32xf32>
    %6 = arith.mulf %0, %0 : vector<16x32xf32>
    %cst = arith.constant dense<0.000000e+00> : vector<16xf32>
    %7 = vector.multi_reduction <add>, %6, %cst [1] : vector<16x32xf32> to vector<16xf32>
    %8 = vector.shape_cast %7 : vector<16xf32> to vector<16x1xf32>
    %cst_10 = arith.constant 3.200000e+01 : f32
    %9 = vector.broadcast %cst_10 : f32 to vector<16x1xf32>
    %10 = arith.divf %8, %9 : vector<16x1xf32>
    %cst_11 = arith.constant 9.99999974E-6 : f32
    %11 = vector.broadcast %cst_11 : f32 to vector<16x1xf32>
    %12 = arith.addf %10, %11 : vector<16x1xf32>
    %13 = math.rsqrt %12 : vector<16x1xf32>
    %14 = vector.broadcast %13 : vector<16x1xf32> to vector<16x32xf32>
    %15 = arith.mulf %0, %14 : vector<16x32xf32>
    %16 = vector.broadcast %5 : vector<1x32xf32> to vector<16x32xf32>
    %17 = arith.mulf %15, %16 : vector<16x32xf32>
    %c0_12 = arith.constant 0 : index
    %c0_13 = arith.constant 0 : index
    %c0_14 = arith.constant 0 : index
    %18 = vector.load %arg7[%c0_12, %c0_13, %c0_14] : memref<2x32x96xbf16, #tpu.memory_space<vmem>>, vector<1x32x96xbf16>
    %19 = vector.shape_cast %18 : vector<1x32x96xbf16> to vector<32x96xbf16>
    %20 = arith.truncf %17 : vector<16x32xf32> to vector<16x32xbf16>
    %cst_15 = arith.constant dense<0.000000e+00> : vector<16x96xf32>
    %21 = tpu.matmul %20, %19, %cst_15 {dimension_numbers = #tpu.dot_dimension_numbers<[1], [0], [0], [1], [0, 0, 1, 1], [], []>} : vector<16x32xbf16>, vector<32x96xbf16>, vector<16x96xf32> -> vector<16x96xf32>
    %22 = vector.extract_strided_slice %21 {offsets = [0, 0], sizes = [16, 32], strides = [1, 1]} : vector<16x96xf32> to vector<16x32xf32>
    %23 = arith.mulf %22, %1 : vector<16x32xf32>
    %24 = vector.extract_strided_slice %21 {offsets = [0, 32], sizes = [16, 32], strides = [1, 1]} : vector<16x96xf32> to vector<16x32xf32>
    %25 = arith.mulf %24, %2 : vector<16x32xf32>
    %26 = arith.addf %23, %25 : vector<16x32xf32>
    %27 = vector.extract_strided_slice %21 {offsets = [0, 64], sizes = [16, 32], strides = [1, 1]} : vector<16x96xf32> to vector<16x32xf32>
    %28 = vector.shape_cast %26 : vector<16x32xf32> to vector<2x8x32xf32>
    %29 = arith.truncf %28 : vector<2x8x32xf32> to vector<2x8x32xbf16>
    %30 = vector.shape_cast %27 : vector<16x32xf32> to vector<2x8x32xf32>
    %31 = arith.truncf %30 : vector<2x8x32xf32> to vector<2x8x32xbf16>
    %c0_16 = arith.constant 0 : index
    %c0_17 = arith.constant 0 : index
    %c0_18 = arith.constant 0 : index
    %c0_19 = arith.constant 0 : index
    %32 = vector.load %arg1[%c0_16, %c0_17, %c0_18, %c0_19] : memref<2x2x32x32xbf16, #tpu.memory_space<vmem>>, vector<1x2x32x32xbf16>
    %33 = vector.shape_cast %32 : vector<1x2x32x32xbf16> to vector<2x32x32xbf16>
    "tpu.trace_start"() <{level = 10 : i32, message = "bqd,bkd->bqk"}> : () -> ()
    %cst_20 = arith.constant dense<0.000000e+00> : vector<2x32x8xf32>
    %34 = tpu.matmul %33, %29, %cst_20 {dimension_numbers = #tpu.dot_dimension_numbers<[2], [2], [1], [1], [0, 0, 0, 1, 1, 1], [0], [0]>} : vector<2x32x32xbf16>, vector<2x8x32xbf16>, vector<2x32x8xf32> -> vector<2x32x8xf32>
    "tpu.trace_stop"() : () -> ()
    %cst_21 = arith.constant dense<0xFF800000> : vector<2x32xf32>
    %35 = vector.multi_reduction <maximumf>, %34, %cst_21 [2] : vector<2x32x8xf32> to vector<2x32xf32>
    %36 = vector.shape_cast %35 : vector<2x32xf32> to vector<2x32x1xf32>
    %37 = vector.broadcast %36 : vector<2x32x1xf32> to vector<2x32x8xf32>
    %38 = arith.subf %34, %37 : vector<2x32x8xf32>
    %39 = math.exp %38 : vector<2x32x8xf32>
    %cst_22 = arith.constant dense<0.000000e+00> : vector<2x32xf32>
    %40 = vector.multi_reduction <add>, %39, %cst_22 [2] : vector<2x32x8xf32> to vector<2x32xf32>
    %41 = vector.shape_cast %40 : vector<2x32xf32> to vector<2x32x1xf32>
    %42 = tpu.reciprocal %41 {approx = true} : vector<2x32x1xf32> -> vector<2x32x1xf32>
    %43 = vector.broadcast %42 : vector<2x32x1xf32> to vector<2x32x8xf32>
    %44 = arith.mulf %39, %43 : vector<2x32x8xf32>
    %45 = arith.truncf %44 : vector<2x32x8xf32> to vector<2x32x8xbf16>
    "tpu.trace_start"() <{level = 10 : i32, message = "bqk,bkd->bqd"}> : () -> ()
    %cst_23 = arith.constant dense<0.000000e+00> : vector<2x32x32xf32>
    %46 = tpu.matmul %45, %31, %cst_23 {dimension_numbers = #tpu.dot_dimension_numbers<[2], [1], [1], [2], [0, 0, 0, 1, 1, 2], [0], [0]>} : vector<2x32x8xbf16>, vector<2x8x32xbf16>, vector<2x32x32xf32> -> vector<2x32x32xf32>
    "tpu.trace_stop"() : () -> ()
    %47 = vector.shape_cast %3 : vector<32x32xf32> to vector<1x32x32xf32>
    %48 = vector.broadcast %47 : vector<1x32x32xf32> to vector<2x32x32xf32>
    %49 = arith.mulf %46, %48 : vector<2x32x32xf32>
    %50 = vector.extract_strided_slice %49 {offsets = [0, 0, 0], sizes = [2, 8, 32], strides = [1, 1, 1]} : vector<2x32x32xf32> to vector<2x8x32xf32>
    %51 = vector.extract_strided_slice %49 {offsets = [0, 8, 0], sizes = [2, 8, 32], strides = [1, 1, 1]} : vector<2x32x32xf32> to vector<2x8x32xf32>
    %52 = arith.addf %50, %51 : vector<2x8x32xf32>
    %53 = vector.extract_strided_slice %49 {offsets = [0, 16, 0], sizes = [2, 8, 32], strides = [1, 1, 1]} : vector<2x32x32xf32> to vector<2x8x32xf32>
    %54 = arith.addf %52, %53 : vector<2x8x32xf32>
    %55 = vector.extract_strided_slice %49 {offsets = [0, 24, 0], sizes = [2, 8, 32], strides = [1, 1, 1]} : vector<2x32x32xf32> to vector<2x8x32xf32>
    %56 = arith.addf %54, %55 : vector<2x8x32xf32>
    %57 = vector.shape_cast %56 : vector<2x8x32xf32> to vector<16x32xf32>
    %c0_24 = arith.constant 0 : index
    %c0_25 = arith.constant 0 : index
    %c0_26 = arith.constant 0 : index
    %58 = vector.load %arg8[%c0_24, %c0_25, %c0_26] : memref<2x32x32xbf16, #tpu.memory_space<vmem>>, vector<1x32x32xbf16>
    %59 = vector.shape_cast %58 : vector<1x32x32xbf16> to vector<32x32xbf16>
    %60 = arith.truncf %57 : vector<16x32xf32> to vector<16x32xbf16>
    %cst_27 = arith.constant dense<0.000000e+00> : vector<16x32xf32>
    %61 = tpu.matmul %60, %59, %cst_27 {dimension_numbers = #tpu.dot_dimension_numbers<[1], [0], [0], [1], [0, 0, 1, 1], [], []>} : vector<16x32xbf16>, vector<32x32xbf16>, vector<16x32xf32> -> vector<16x32xf32>
    %62 = arith.addf %0, %61 : vector<16x32xf32>
    %c0_28 = arith.constant 0 : index
    %c0_29 = arith.constant 0 : index
    %c0_30 = arith.constant 0 : index
    %63 = vector.load %arg6[%c0_28, %c0_29, %c0_30] : memref<2x1x32xf32, #tpu.memory_space<vmem>>, vector<1x1x32xf32>
    %64 = vector.shape_cast %63 : vector<1x1x32xf32> to vector<1x32xf32>
    %65 = arith.mulf %62, %62 : vector<16x32xf32>
    %cst_31 = arith.constant dense<0.000000e+00> : vector<16xf32>
    %66 = vector.multi_reduction <add>, %65, %cst_31 [1] : vector<16x32xf32> to vector<16xf32>
    %67 = vector.shape_cast %66 : vector<16xf32> to vector<16x1xf32>
    %cst_32 = arith.constant 3.200000e+01 : f32
    %68 = vector.broadcast %cst_32 : f32 to vector<16x1xf32>
    %69 = arith.divf %67, %68 : vector<16x1xf32>
    %cst_33 = arith.constant 9.99999974E-6 : f32
    %70 = vector.broadcast %cst_33 : f32 to vector<16x1xf32>
    %71 = arith.addf %69, %70 : vector<16x1xf32>
    %72 = math.rsqrt %71 : vector<16x1xf32>
    %73 = vector.broadcast %72 : vector<16x1xf32> to vector<16x32xf32>
    %74 = arith.mulf %62, %73 : vector<16x32xf32>
    %75 = vector.broadcast %64 : vector<1x32xf32> to vector<16x32xf32>
    %76 = arith.mulf %74, %75 : vector<16x32xf32>
    %c0_34 = arith.constant 0 : index
    %c0_35 = arith.constant 0 : index
    %c0_36 = arith.constant 0 : index
    %77 = vector.load %arg9[%c0_34, %c0_35, %c0_36] : memref<2x32x192xbf16, #tpu.memory_space<vmem>>, vector<1x32x192xbf16>
    %78 = vector.shape_cast %77 : vector<1x32x192xbf16> to vector<32x192xbf16>
    %79 = arith.truncf %76 : vector<16x32xf32> to vector<16x32xbf16>
    %cst_37 = arith.constant dense<0.000000e+00> : vector<16x192xf32>
    %80 = tpu.matmul %79, %78, %cst_37 {dimension_numbers = #tpu.dot_dimension_numbers<[1], [0], [0], [1], [0, 0, 1, 1], [], []>} : vector<16x32xbf16>, vector<32x192xbf16>, vector<16x192xf32> -> vector<16x192xf32>
    %81 = vector.extract_strided_slice %80 {offsets = [0, 0], sizes = [16, 96], strides = [1, 1]} : vector<16x192xf32> to vector<16x96xf32>
    %82 = vector.extract_strided_slice %80 {offsets = [0, 96], sizes = [16, 96], strides = [1, 1]} : vector<16x192xf32> to vector<16x96xf32>
    %cst_38 = arith.constant 0.000000e+00 : f32
    %83 = vector.broadcast %cst_38 : f32 to vector<16x96xf32>
    %84 = arith.subf %83, %81 : vector<16x96xf32>
    %85 = math.exp %84 : vector<16x96xf32>
    %cst_39 = arith.constant 1.000000e+00 : f32
    %86 = vector.broadcast %cst_39 : f32 to vector<16x96xf32>
    %87 = arith.addf %86, %85 : vector<16x96xf32>
    %88 = tpu.reciprocal %87 {approx = true} : vector<16x96xf32> -> vector<16x96xf32>
    %89 = arith.mulf %81, %88 : vector<16x96xf32>
    %90 = arith.mulf %89, %82 : vector<16x96xf32>
    %c0_40 = arith.constant 0 : index
    %c0_41 = arith.constant 0 : index
    %c0_42 = arith.constant 0 : index
    %91 = vector.load %arg10[%c0_40, %c0_41, %c0_42] : memref<2x96x32xbf16, #tpu.memory_space<vmem>>, vector<1x96x32xbf16>
    %92 = vector.shape_cast %91 : vector<1x96x32xbf16> to vector<96x32xbf16>
    %93 = arith.truncf %90 : vector<16x96xf32> to vector<16x96xbf16>
    %cst_43 = arith.constant dense<0.000000e+00> : vector<16x32xf32>
    %94 = tpu.matmul %93, %92, %cst_43 {dimension_numbers = #tpu.dot_dimension_numbers<[1], [0], [0], [1], [0, 0, 1, 1], [], []>} : vector<16x96xbf16>, vector<96x32xbf16>, vector<16x32xf32> -> vector<16x32xf32>
    %95 = arith.addf %62, %94 : vector<16x32xf32>
    %c1 = arith.constant 1 : index
    %c0_44 = arith.constant 0 : index
    %c0_45 = arith.constant 0 : index
    %96 = vector.load %arg5[%c1, %c0_44, %c0_45] : memref<2x1x32xf32, #tpu.memory_space<vmem>>, vector<1x1x32xf32>
    %97 = vector.shape_cast %96 : vector<1x1x32xf32> to vector<1x32xf32>
    %98 = arith.mulf %95, %95 : vector<16x32xf32>
    %cst_46 = arith.constant dense<0.000000e+00> : vector<16xf32>
    %99 = vector.multi_reduction <add>, %98, %cst_46 [1] : vector<16x32xf32> to vector<16xf32>
    %100 = vector.shape_cast %99 : vector<16xf32> to vector<16x1xf32>
    %cst_47 = arith.constant 3.200000e+01 : f32
    %101 = vector.broadcast %cst_47 : f32 to vector<16x1xf32>
    %102 = arith.divf %100, %101 : vector<16x1xf32>
    %cst_48 = arith.constant 9.99999974E-6 : f32
    %103 = vector.broadcast %cst_48 : f32 to vector<16x1xf32>
    %104 = arith.addf %102, %103 : vector<16x1xf32>
    %105 = math.rsqrt %104 : vector<16x1xf32>
    %106 = vector.broadcast %105 : vector<16x1xf32> to vector<16x32xf32>
    %107 = arith.mulf %95, %106 : vector<16x32xf32>
    %108 = vector.broadcast %97 : vector<1x32xf32> to vector<16x32xf32>
    %109 = arith.mulf %107, %108 : vector<16x32xf32>
    %c1_49 = arith.constant 1 : index
    %c0_50 = arith.constant 0 : index
    %c0_51 = arith.constant 0 : index
    %110 = vector.load %arg7[%c1_49, %c0_50, %c0_51] : memref<2x32x96xbf16, #tpu.memory_space<vmem>>, vector<1x32x96xbf16>
    %111 = vector.shape_cast %110 : vector<1x32x96xbf16> to vector<32x96xbf16>
    %112 = arith.truncf %109 : vector<16x32xf32> to vector<16x32xbf16>
    %cst_52 = arith.constant dense<0.000000e+00> : vector<16x96xf32>
    %113 = tpu.matmul %112, %111, %cst_52 {dimension_numbers = #tpu.dot_dimension_numbers<[1], [0], [0], [1], [0, 0, 1, 1], [], []>} : vector<16x32xbf16>, vector<32x96xbf16>, vector<16x96xf32> -> vector<16x96xf32>
    %114 = vector.extract_strided_slice %113 {offsets = [0, 0], sizes = [16, 32], strides = [1, 1]} : vector<16x96xf32> to vector<16x32xf32>
    %115 = arith.mulf %114, %1 : vector<16x32xf32>
    %116 = vector.extract_strided_slice %113 {offsets = [0, 32], sizes = [16, 32], strides = [1, 1]} : vector<16x96xf32> to vector<16x32xf32>
    %117 = arith.mulf %116, %2 : vector<16x32xf32>
    %118 = arith.addf %115, %117 : vector<16x32xf32>
    %119 = vector.extract_strided_slice %113 {offsets = [0, 64], sizes = [16, 32], strides = [1, 1]} : vector<16x96xf32> to vector<16x32xf32>
    %120 = vector.shape_cast %118 : vector<16x32xf32> to vector<2x8x32xf32>
    %121 = arith.truncf %120 : vector<2x8x32xf32> to vector<2x8x32xbf16>
    %122 = vector.shape_cast %119 : vector<16x32xf32> to vector<2x8x32xf32>
    %123 = arith.truncf %122 : vector<2x8x32xf32> to vector<2x8x32xbf16>
    %c1_53 = arith.constant 1 : index
    %c0_54 = arith.constant 0 : index
    %c0_55 = arith.constant 0 : index
    %c0_56 = arith.constant 0 : index
    %124 = vector.load %arg1[%c1_53, %c0_54, %c0_55, %c0_56] : memref<2x2x32x32xbf16, #tpu.memory_space<vmem>>, vector<1x2x32x32xbf16>
    %125 = vector.shape_cast %124 : vector<1x2x32x32xbf16> to vector<2x32x32xbf16>
    "tpu.trace_start"() <{level = 10 : i32, message = "bqd,bkd->bqk"}> : () -> ()
    %cst_57 = arith.constant dense<0.000000e+00> : vector<2x32x8xf32>
    %126 = tpu.matmul %125, %121, %cst_57 {dimension_numbers = #tpu.dot_dimension_numbers<[2], [2], [1], [1], [0, 0, 0, 1, 1, 1], [0], [0]>} : vector<2x32x32xbf16>, vector<2x8x32xbf16>, vector<2x32x8xf32> -> vector<2x32x8xf32>
    "tpu.trace_stop"() : () -> ()
    %cst_58 = arith.constant dense<0xFF800000> : vector<2x32xf32>
    %127 = vector.multi_reduction <maximumf>, %126, %cst_58 [2] : vector<2x32x8xf32> to vector<2x32xf32>
    %128 = vector.shape_cast %127 : vector<2x32xf32> to vector<2x32x1xf32>
    %129 = vector.broadcast %128 : vector<2x32x1xf32> to vector<2x32x8xf32>
    %130 = arith.subf %126, %129 : vector<2x32x8xf32>
    %131 = math.exp %130 : vector<2x32x8xf32>
    %cst_59 = arith.constant dense<0.000000e+00> : vector<2x32xf32>
    %132 = vector.multi_reduction <add>, %131, %cst_59 [2] : vector<2x32x8xf32> to vector<2x32xf32>
    %133 = vector.shape_cast %132 : vector<2x32xf32> to vector<2x32x1xf32>
    %134 = tpu.reciprocal %133 {approx = true} : vector<2x32x1xf32> -> vector<2x32x1xf32>
    %135 = vector.broadcast %134 : vector<2x32x1xf32> to vector<2x32x8xf32>
    %136 = arith.mulf %131, %135 : vector<2x32x8xf32>
    %137 = arith.truncf %136 : vector<2x32x8xf32> to vector<2x32x8xbf16>
    "tpu.trace_start"() <{level = 10 : i32, message = "bqk,bkd->bqd"}> : () -> ()
    %cst_60 = arith.constant dense<0.000000e+00> : vector<2x32x32xf32>
    %138 = tpu.matmul %137, %123, %cst_60 {dimension_numbers = #tpu.dot_dimension_numbers<[2], [1], [1], [2], [0, 0, 0, 1, 1, 2], [0], [0]>} : vector<2x32x8xbf16>, vector<2x8x32xbf16>, vector<2x32x32xf32> -> vector<2x32x32xf32>
    "tpu.trace_stop"() : () -> ()
    %139 = vector.shape_cast %3 : vector<32x32xf32> to vector<1x32x32xf32>
    %140 = vector.broadcast %139 : vector<1x32x32xf32> to vector<2x32x32xf32>
    %141 = arith.mulf %138, %140 : vector<2x32x32xf32>
    %142 = vector.extract_strided_slice %141 {offsets = [0, 0, 0], sizes = [2, 8, 32], strides = [1, 1, 1]} : vector<2x32x32xf32> to vector<2x8x32xf32>
    %143 = vector.extract_strided_slice %141 {offsets = [0, 8, 0], sizes = [2, 8, 32], strides = [1, 1, 1]} : vector<2x32x32xf32> to vector<2x8x32xf32>
    %144 = arith.addf %142, %143 : vector<2x8x32xf32>
    %145 = vector.extract_strided_slice %141 {offsets = [0, 16, 0], sizes = [2, 8, 32], strides = [1, 1, 1]} : vector<2x32x32xf32> to vector<2x8x32xf32>
    %146 = arith.addf %144, %145 : vector<2x8x32xf32>
    %147 = vector.extract_strided_slice %141 {offsets = [0, 24, 0], sizes = [2, 8, 32], strides = [1, 1, 1]} : vector<2x32x32xf32> to vector<2x8x32xf32>
    %148 = arith.addf %146, %147 : vector<2x8x32xf32>
    %149 = vector.shape_cast %148 : vector<2x8x32xf32> to vector<16x32xf32>
    %c1_61 = arith.constant 1 : index
    %c0_62 = arith.constant 0 : index
    %c0_63 = arith.constant 0 : index
    %150 = vector.load %arg8[%c1_61, %c0_62, %c0_63] : memref<2x32x32xbf16, #tpu.memory_space<vmem>>, vector<1x32x32xbf16>
    %151 = vector.shape_cast %150 : vector<1x32x32xbf16> to vector<32x32xbf16>
    %152 = arith.truncf %149 : vector<16x32xf32> to vector<16x32xbf16>
    %cst_64 = arith.constant dense<0.000000e+00> : vector<16x32xf32>
    %153 = tpu.matmul %152, %151, %cst_64 {dimension_numbers = #tpu.dot_dimension_numbers<[1], [0], [0], [1], [0, 0, 1, 1], [], []>} : vector<16x32xbf16>, vector<32x32xbf16>, vector<16x32xf32> -> vector<16x32xf32>
    %154 = arith.addf %95, %153 : vector<16x32xf32>
    %c1_65 = arith.constant 1 : index
    %c0_66 = arith.constant 0 : index
    %c0_67 = arith.constant 0 : index
    %155 = vector.load %arg6[%c1_65, %c0_66, %c0_67] : memref<2x1x32xf32, #tpu.memory_space<vmem>>, vector<1x1x32xf32>
    %156 = vector.shape_cast %155 : vector<1x1x32xf32> to vector<1x32xf32>
    %157 = arith.mulf %154, %154 : vector<16x32xf32>
    %cst_68 = arith.constant dense<0.000000e+00> : vector<16xf32>
    %158 = vector.multi_reduction <add>, %157, %cst_68 [1] : vector<16x32xf32> to vector<16xf32>
    %159 = vector.shape_cast %158 : vector<16xf32> to vector<16x1xf32>
    %cst_69 = arith.constant 3.200000e+01 : f32
    %160 = vector.broadcast %cst_69 : f32 to vector<16x1xf32>
    %161 = arith.divf %159, %160 : vector<16x1xf32>
    %cst_70 = arith.constant 9.99999974E-6 : f32
    %162 = vector.broadcast %cst_70 : f32 to vector<16x1xf32>
    %163 = arith.addf %161, %162 : vector<16x1xf32>
    %164 = math.rsqrt %163 : vector<16x1xf32>
    %165 = vector.broadcast %164 : vector<16x1xf32> to vector<16x32xf32>
    %166 = arith.mulf %154, %165 : vector<16x32xf32>
    %167 = vector.broadcast %156 : vector<1x32xf32> to vector<16x32xf32>
    %168 = arith.mulf %166, %167 : vector<16x32xf32>
    %c1_71 = arith.constant 1 : index
    %c0_72 = arith.constant 0 : index
    %c0_73 = arith.constant 0 : index
    %169 = vector.load %arg9[%c1_71, %c0_72, %c0_73] : memref<2x32x192xbf16, #tpu.memory_space<vmem>>, vector<1x32x192xbf16>
    %170 = vector.shape_cast %169 : vector<1x32x192xbf16> to vector<32x192xbf16>
    %171 = arith.truncf %168 : vector<16x32xf32> to vector<16x32xbf16>
    %cst_74 = arith.constant dense<0.000000e+00> : vector<16x192xf32>
    %172 = tpu.matmul %171, %170, %cst_74 {dimension_numbers = #tpu.dot_dimension_numbers<[1], [0], [0], [1], [0, 0, 1, 1], [], []>} : vector<16x32xbf16>, vector<32x192xbf16>, vector<16x192xf32> -> vector<16x192xf32>
    %173 = vector.extract_strided_slice %172 {offsets = [0, 0], sizes = [16, 96], strides = [1, 1]} : vector<16x192xf32> to vector<16x96xf32>
    %174 = vector.extract_strided_slice %172 {offsets = [0, 96], sizes = [16, 96], strides = [1, 1]} : vector<16x192xf32> to vector<16x96xf32>
    %cst_75 = arith.constant 0.000000e+00 : f32
    %175 = vector.broadcast %cst_75 : f32 to vector<16x96xf32>
    %176 = arith.subf %175, %173 : vector<16x96xf32>
    %177 = math.exp %176 : vector<16x96xf32>
    %cst_76 = arith.constant 1.000000e+00 : f32
    %178 = vector.broadcast %cst_76 : f32 to vector<16x96xf32>
    %179 = arith.addf %178, %177 : vector<16x96xf32>
    %180 = tpu.reciprocal %179 {approx = true} : vector<16x96xf32> -> vector<16x96xf32>
    %181 = arith.mulf %173, %180 : vector<16x96xf32>
    %182 = arith.mulf %181, %174 : vector<16x96xf32>
    %c1_77 = arith.constant 1 : index
    %c0_78 = arith.constant 0 : index
    %c0_79 = arith.constant 0 : index
    %183 = vector.load %arg10[%c1_77, %c0_78, %c0_79] : memref<2x96x32xbf16, #tpu.memory_space<vmem>>, vector<1x96x32xbf16>
    %184 = vector.shape_cast %183 : vector<1x96x32xbf16> to vector<96x32xbf16>
    %185 = arith.truncf %182 : vector<16x96xf32> to vector<16x96xbf16>
    %cst_80 = arith.constant dense<0.000000e+00> : vector<16x32xf32>
    %186 = tpu.matmul %185, %184, %cst_80 {dimension_numbers = #tpu.dot_dimension_numbers<[1], [0], [0], [1], [0, 0, 1, 1], [], []>} : vector<16x96xbf16>, vector<96x32xbf16>, vector<16x32xf32> -> vector<16x32xf32>
    %187 = arith.addf %154, %186 : vector<16x32xf32>
    %c0_81 = arith.constant 0 : index
    %c0_82 = arith.constant 0 : index
    %188 = vector.load %arg11[%c0_81, %c0_82] : memref<1x32xf32, #tpu.memory_space<vmem>>, vector<1x32xf32>
    %189 = arith.mulf %187, %187 : vector<16x32xf32>
    %cst_83 = arith.constant dense<0.000000e+00> : vector<16xf32>
    %190 = vector.multi_reduction <add>, %189, %cst_83 [1] : vector<16x32xf32> to vector<16xf32>
    %191 = vector.shape_cast %190 : vector<16xf32> to vector<16x1xf32>
    %cst_84 = arith.constant 3.200000e+01 : f32
    %192 = vector.broadcast %cst_84 : f32 to vector<16x1xf32>
    %193 = arith.divf %191, %192 : vector<16x1xf32>
    %cst_85 = arith.constant 9.99999974E-6 : f32
    %194 = vector.broadcast %cst_85 : f32 to vector<16x1xf32>
    %195 = arith.addf %193, %194 : vector<16x1xf32>
    %196 = math.rsqrt %195 : vector<16x1xf32>
    %197 = vector.broadcast %196 : vector<16x1xf32> to vector<16x32xf32>
    %198 = arith.mulf %187, %197 : vector<16x32xf32>
    %199 = vector.broadcast %188 : vector<1x32xf32> to vector<16x32xf32>
    %200 = arith.mulf %198, %199 : vector<16x32xf32>
    %c0_86 = arith.constant 0 : index
    %c0_87 = arith.constant 0 : index
    %201 = vector.load %arg12[%c0_86, %c0_87] : memref<32x64xbf16, #tpu.memory_space<vmem>>, vector<32x64xbf16>
    %202 = arith.truncf %200 : vector<16x32xf32> to vector<16x32xbf16>
    %cst_88 = arith.constant dense<0.000000e+00> : vector<16x64xf32>
    %203 = tpu.matmul %202, %201, %cst_88 {dimension_numbers = #tpu.dot_dimension_numbers<[1], [0], [0], [1], [0, 0, 1, 1], [], []>} : vector<16x32xbf16>, vector<32x64xbf16>, vector<16x64xf32> -> vector<16x64xf32>
    %c0_89 = arith.constant 0 : index
    %c0_90 = arith.constant 0 : index
    %204 = vector.load %arg13[%c0_89, %c0_90] : memref<16x64xf32, #tpu.memory_space<vmem>>, vector<16x64xf32>
    tpu.vector_store %arg13[%c0_89, %c0_90], %203 {strides = array<i32>} : memref<16x64xf32, #tpu.memory_space<vmem>>, vector<16x64xf32>,
    return
  }
}

</mosaic_0001>

<llo_original>
// kernel: tpu_custom_call.1
$region0: #{tpu_custom_call.1}
  #allocation0 [shape = 'u32[]', space=smem, size = 0x4, offset = 0x4, fixed_abs, tag = 'smem constant byte address 0x4 - core index']
  #allocation1 [shape = 'u32[72,128]{1,0:T(1,128)}', space=vmem, size = 0x9000, scoped, tag = 'internal scratch']
  %s0 = inlined_call_operand.hbm [shape: f32[16,32], index: 0, kind: input, shape index: {}]
  %s1 = inlined_call_operand.vmem [shape: bf16[2,2,32,32], index: 1, kind: input, shape index: {}]
  %s2 = inlined_call_operand.hbm [shape: f32[16,32], index: 2, kind: input, shape index: {}]
  %s3 = inlined_call_operand.hbm [shape: f32[16,32], index: 3, kind: input, shape index: {}]
  %s4 = inlined_call_operand.hbm [shape: f32[32,32], index: 4, kind: input, shape index: {}]
  %s5 = inlined_call_operand.vmem [shape: f32[2,1,32], index: 5, kind: input, shape index: {}]
  %s6 = inlined_call_operand.vmem [shape: f32[2,1,32], index: 6, kind: input, shape index: {}]
  %s7 = inlined_call_operand.hbm [shape: bf16[2,32,96], index: 7, kind: input, shape index: {}]
  %s8 = inlined_call_operand.hbm [shape: bf16[2,32,32], index: 8, kind: input, shape index: {}]
  %s9 = inlined_call_operand.vmem [shape: bf16[2,32,192], index: 9, kind: input, shape index: {}]
  %s10 = inlined_call_operand.vmem [shape: bf16[2,96,32], index: 10, kind: input, shape index: {}]
  %s11 = inlined_call_operand.vmem [shape: f32[1,32], index: 11, kind: input, shape index: {}]
  %s12 = inlined_call_operand.hbm [shape: bf16[32,64], index: 12, kind: input, shape index: {}]
  %s13 = inlined_call_operand.hbm [shape: f32[16,64], index: 13, kind: output, shape index: {}]
  %s14 = sld [smem:[#allocation0]]
  $region90: #{tpu_custom_call.1} parent=0
    _
  %s16 = ssub.s32 1, %s14
  %s17 = scalar_select 0, %s16, %s14
  $region1: #{tpu_custom_call.1} parent=0
    #allocation2 [shape = 'u8[8192]{0}', space=vmem, size = 0x2000, scoped, tag = 'input window, operand 0, single buffered']
    #allocation3 [shape = 's32[1]{0}', space=sflag, size = 0x4, scoped, tag = 'scoped memory for tpu_custom_call.1']
    #allocation4 [shape = 's32[1]{0}', space=sflag, size = 0x4, scoped, tag = 'scoped memory for tpu_custom_call.1']
    #allocation5 [shape = 'u8[8192]{0}', space=vmem, size = 0x2000, scoped, tag = 'input window, operand 2, single buffered']
    #allocation6 [shape = 's32[1]{0}', space=sflag, size = 0x4, scoped, tag = 'scoped memory for tpu_custom_call.1']
    #allocation7 [shape = 'u8[8192]{0}', space=vmem, size = 0x2000, scoped, tag = 'input window, operand 3, single buffered']
    #allocation8 [shape = 'u8[16384]{0}', space=vmem, size = 0x4000, scoped, tag = 'input window, operand 4, single buffered']
    #allocation9 [shape = 's32[1]{0}', space=sflag, size = 0x4, scoped, tag = 'scoped memory for tpu_custom_call.1']
    #allocation10 [shape = 'u8[16384]{0}', space=vmem, size = 0x4000, scoped, tag = 'input window, operand 7, single buffered']
    #allocation11 [shape = 'u8[16384]{0}', space=vmem, size = 0x4000, scoped, tag = 'input window, operand 8, single buffered']
    #allocation12 [shape = 's32[1]{0}', space=sflag, size = 0x4, scoped, tag = 'scoped memory for tpu_custom_call.1']
    #allocation13 [shape = 'u8[8192]{0}', space=vmem, size = 0x2000, scoped, tag = 'input window, operand 12, single buffered']
    #allocation14 [shape = 'u8[8192]{0}', space=vmem, size = 0x2000, scoped, tag = 'output window, operand 0, single buffered']
    %18 = vsyncpa [#allocation3], 0
    %19 = vsyncpa [#allocation6], 0
    %20 = vsyncpa [#allocation9], 0
    %21 = vsyncpa [#allocation12], 0
    %22 = vsyncpa [#allocation4], 0
    // Predicated region
    $region2: #{tpu_custom_call.1} parent=1 // pred_check
      _
    $region3: #{tpu_custom_call.1} parent=1 // pred_check_branch
      %24 = sbr.rel (0) target = $region5
    $region4: #{tpu_custom_call.1} parent=1 // pred_region
      %26 = vsyncadd [#allocation3], 0
      %s27 = sshll.u32 %s0, 4
      %s28 = int_to_ptr.hbm [resolvable:$true] %s27
      %s29 = sshll.u32 [#allocation2], 4
      %s30 = int_to_ptr.vmem [resolvable:$true] %s29
      %35 = dma.hbm_to_vmem [thread:$0]  %s28, 256, %s30, [#allocation3], 128, 128, 8
    $region5: #{tpu_custom_call.1} parent=1 // pred_fallthru
      _
    // Predicated region
    $region6: #{tpu_custom_call.1} parent=1 // pred_check
      _
    $region7: #{tpu_custom_call.1} parent=1 // pred_check_branch
      %37 = sbr.rel (0) target = $region9
    $region8: #{tpu_custom_call.1} parent=1 // pred_region
      _
    $region9: #{tpu_custom_call.1} parent=1 // pred_fallthru
      _
    // Predicated region
    $region10: #{tpu_custom_call.1} parent=1 // pred_check
      _
    $region11: #{tpu_custom_call.1} parent=1 // pred_check_branch
      %39 = sbr.rel (0) target = $region13
    $region12: #{tpu_custom_call.1} parent=1 // pred_region
      %41 = vsyncadd [#allocation6], 0
      %s42 = sshll.u32 %s2, 4
      %s43 = int_to_ptr.hbm [resolvable:$true] %s42
      %s44 = sshll.u32 [#allocation5], 4
      %s45 = int_to_ptr.vmem [resolvable:$true] %s44
      %50 = dma.hbm_to_vmem [thread:$0]  %s43, 256, %s45, [#allocation6], 128, 128, 8
    $region13: #{tpu_custom_call.1} parent=1 // pred_fallthru
      _
    // Predicated region
    $region14: #{tpu_custom_call.1} parent=1 // pred_check
      _
    $region15: #{tpu_custom_call.1} parent=1 // pred_check_branch
      %52 = sbr.rel (0) target = $region17
    $region16: #{tpu_custom_call.1} parent=1 // pred_region
      %54 = vsyncadd [#allocation6], 0
      %s55 = sshll.u32 %s3, 4
      %s56 = int_to_ptr.hbm [resolvable:$true] %s55
      %s57 = sshll.u32 [#allocation7], 4
      %s58 = int_to_ptr.vmem [resolvable:$true] %s57
      %63 = dma.hbm_to_vmem [thread:$0]  %s56, 256, %s58, [#allocation6], 128, 128, 8
    $region17: #{tpu_custom_call.1} parent=1 // pred_fallthru
      _
    // Predicated region
    $region18: #{tpu_custom_call.1} parent=1 // pred_check
      _
    $region19: #{tpu_custom_call.1} parent=1 // pred_check_branch
      %65 = sbr.rel (0) target = $region21
    $region20: #{tpu_custom_call.1} parent=1 // pred_region
      %67 = vsyncadd [#allocation9], 0
      %s68 = sshll.u32 %s4, 4
      %s69 = int_to_ptr.hbm [resolvable:$true] %s68
      %s70 = sshll.u32 [#allocation8], 4
      %s71 = int_to_ptr.vmem [resolvable:$true] %s70
      %76 = dma.hbm_to_vmem [thread:$0]  %s69, 512, %s71, [#allocation9], 128, 128, 8
    $region21: #{tpu_custom_call.1} parent=1 // pred_fallthru
      _
    // Predicated region
    $region22: #{tpu_custom_call.1} parent=1 // pred_check
      _
    $region23: #{tpu_custom_call.1} parent=1 // pred_check_branch
      %78 = sbr.rel (0) target = $region25
    $region24: #{tpu_custom_call.1} parent=1 // pred_region
      _
    $region25: #{tpu_custom_call.1} parent=1 // pred_fallthru
      _
    // Predicated region
    $region26: #{tpu_custom_call.1} parent=1 // pred_check
      _
    $region27: #{tpu_custom_call.1} parent=1 // pred_check_branch
      %80 = sbr.rel (0) target = $region29
    $region28: #{tpu_custom_call.1} parent=1 // pred_region
      _
    $region29: #{tpu_custom_call.1} parent=1 // pred_fallthru
      _
    // Predicated region
    $region30: #{tpu_custom_call.1} parent=1 // pred_check
      _
    $region31: #{tpu_custom_call.1} parent=1 // pred_check_branch
      %82 = sbr.rel (0) target = $region33
    $region32: #{tpu_custom_call.1} parent=1 // pred_region
      %84 = vsyncadd [#allocation9], 0
      %s85 = sshll.u32 %s7, 4
      %s86 = int_to_ptr.hbm [resolvable:$true] %s85
      %s87 = sshll.u32 [#allocation10], 4
      %s88 = int_to_ptr.vmem [resolvable:$true] %s87
      %93 = dma.hbm_to_vmem [thread:$0]  %s86, 512, %s88, [#allocation9], 64, 64, 4
    $region33: #{tpu_custom_call.1} parent=1 // pred_fallthru
      _
    // Predicated region
    $region34: #{tpu_custom_call.1} parent=1 // pred_check
      _
    $region35: #{tpu_custom_call.1} parent=1 // pred_check_branch
      %95 = sbr.rel (0) target = $region37
    $region36: #{tpu_custom_call.1} parent=1 // pred_region
      %97 = vsyncadd [#allocation12], 0
      %s98 = sshll.u32 %s8, 4
      %s99 = int_to_ptr.hbm [resolvable:$true] %s98
      %s100 = sshll.u32 [#allocation11], 4
      %s101 = int_to_ptr.vmem [resolvable:$true] %s100
      %106 = dma.hbm_to_vmem [thread:$0]  %s99, 512, %s101, [#allocation12], 64, 64, 4
    $region37: #{tpu_custom_call.1} parent=1 // pred_fallthru
      _
    // Predicated region
    $region38: #{tpu_custom_call.1} parent=1 // pred_check
      _
    $region39: #{tpu_custom_call.1} parent=1 // pred_check_branch
      %108 = sbr.rel (0) target = $region41
    $region40: #{tpu_custom_call.1} parent=1 // pred_region
      _
    $region41: #{tpu_custom_call.1} parent=1 // pred_fallthru
      _
    // Predicated region
    $region42: #{tpu_custom_call.1} parent=1 // pred_check
      _
    $region43: #{tpu_custom_call.1} parent=1 // pred_check_branch
      %110 = sbr.rel (0) target = $region45
    $region44: #{tpu_custom_call.1} parent=1 // pred_region
      _
    $region45: #{tpu_custom_call.1} parent=1 // pred_fallthru
      _
    // Predicated region
    $region46: #{tpu_custom_call.1} parent=1 // pred_check
      _
    $region47: #{tpu_custom_call.1} parent=1 // pred_check_branch
      %112 = sbr.rel (0) target = $region49
    $region48: #{tpu_custom_call.1} parent=1 // pred_region
      _
    $region49: #{tpu_custom_call.1} parent=1 // pred_fallthru
      _
    // Predicated region
    $region50: #{tpu_custom_call.1} parent=1 // pred_check
      _
    $region51: #{tpu_custom_call.1} parent=1 // pred_check_branch
      %114 = sbr.rel (0) target = $region53
    $region52: #{tpu_custom_call.1} parent=1 // pred_region
      %116 = vsyncadd [#allocation12], 0
      %s117 = sshll.u32 %s12, 4
      %s118 = int_to_ptr.hbm [resolvable:$true] %s117
      %s119 = sshll.u32 [#allocation13], 4
      %s120 = int_to_ptr.vmem [resolvable:$true] %s119
      %125 = dma.hbm_to_vmem [thread:$0]  %s118, 256, %s120, [#allocation12], 64, 64, 4
    $region53: #{tpu_custom_call.1} parent=1 // pred_fallthru
      _
    // Predicated region
    $region54: #{tpu_custom_call.1} parent=1 // pred_check
      _
    $region55: #{tpu_custom_call.1} parent=1 // pred_check_branch
      %127 = sbr.rel (0) target = $region57
    $region56: #{tpu_custom_call.1} parent=1 // pred_region
      %129 = dma.done [#allocation3], 256
    $region57: #{tpu_custom_call.1} parent=1 // pred_fallthru
      _
    // Predicated region
    $region58: #{tpu_custom_call.1} parent=1 // pred_check
      _
    $region59: #{tpu_custom_call.1} parent=1 // pred_check_branch
      %131 = sbr.rel (0) target = $region61
    $region60: #{tpu_custom_call.1} parent=1 // pred_region
      %133 = dma.done [#allocation6], 256
    $region61: #{tpu_custom_call.1} parent=1 // pred_fallthru
      _
    // Predicated region
    $region62: #{tpu_custom_call.1} parent=1 // pred_check
      _
    $region63: #{tpu_custom_call.1} parent=1 // pred_check_branch
      %135 = sbr.rel (0) target = $region65
    $region64: #{tpu_custom_call.1} parent=1 // pred_region
      %137 = dma.done [#allocation6], 256
    $region65: #{tpu_custom_call.1} parent=1 // pred_fallthru
      _
    // Predicated region
    $region66: #{tpu_custom_call.1} parent=1 // pred_check
      _
    $region67: #{tpu_custom_call.1} parent=1 // pred_check_branch
      %139 = sbr.rel (0) target = $region69
    $region68: #{tpu_custom_call.1} parent=1 // pred_region
      %141 = dma.done [#allocation9], 512
    $region69: #{tpu_custom_call.1} parent=1 // pred_fallthru
      _
    // Predicated region
    $region70: #{tpu_custom_call.1} parent=1 // pred_check
      _
    $region71: #{tpu_custom_call.1} parent=1 // pred_check_branch
      %143 = sbr.rel (0) target = $region73
    $region72: #{tpu_custom_call.1} parent=1 // pred_region
      %145 = dma.done [#allocation9], 512
    $region73: #{tpu_custom_call.1} parent=1 // pred_fallthru
      _
    // Predicated region
    $region74: #{tpu_custom_call.1} parent=1 // pred_check
      _
    $region75: #{tpu_custom_call.1} parent=1 // pred_check_branch
      %147 = sbr.rel (0) target = $region77
    $region76: #{tpu_custom_call.1} parent=1 // pred_region
      %149 = dma.done [#allocation12], 512
    $region77: #{tpu_custom_call.1} parent=1 // pred_fallthru
      _
    // Predicated region
    $region78: #{tpu_custom_call.1} parent=1 // pred_check
      _
    $region79: #{tpu_custom_call.1} parent=1 // pred_check_branch
      %151 = sbr.rel (0) target = $region81
    $region80: #{tpu_custom_call.1} parent=1 // pred_region
      %153 = dma.done [#allocation12], 256
    $region81: #{tpu_custom_call.1} parent=1 // pred_fallthru
      _
    %v155 = vld [vmem:[#allocation2] sm:$0xff]
    %v156 = vld [vmem:[#allocation2 + $0x8] sm:$0xff]
    %v157 = vld [vmem:[#allocation5] sm:$0xff]
    %v158 = vld [vmem:[#allocation5 + $0x8] sm:$0xff]
    %v159 = vld [vmem:[#allocation7] sm:$0xff]
    %v160 = vld [vmem:[#allocation7 + $0x8] sm:$0xff]
    %v161 = vld [vmem:[#allocation8] sm:$0xff]
    %v162 = vld [vmem:[#allocation8 + $0x8] sm:$0xff]
    %v163 = vld [vmem:[#allocation8 + $0x10] sm:$0xff]
    %v164 = vld [vmem:[#allocation8 + $0x18] sm:$0xff]
    %v165 = vld [vmem:[%s5] sm:$0x1]
    %v166 = vmul.f32 %v155, %v155
    %v167 = vmul.f32 %v156, %v156
    %vm168 = vcmask 261120
    %v169 = vsel %vm168, %v166, 0.0
    %170 = vadd.xlane.f32.xlu0 %v169
    %v171 = vpop.xlane.xlu0 %170
    %v172 = vsel %vm168, %v167, 0.0
    %173 = vadd.xlane.f32.xlu0 %v172
    %v174 = vpop.xlane.xlu0 %173
    %v175 = vrcp.pop 32.0
    %v176 = vmul.f32 32.0, %v175
    %v177 = vsub.f32 1.0, %v176
    %v178 = vmul.f32 %v175, %v177
    %v179 = vadd.f32 %v175, %v178
    %vm180 = vweird.f32 %v175
    %v181 = vsel %vm180, %v175, %v179
    %v182 = vmul.f32 %v171, %v181
    %v183 = vmul.f32 %v174, %v181
    %v184 = vadd.f32 %v182, 1e-05
    %v185 = vadd.f32 %v183, 1e-05
    %v186 = vrsqrt.pop %v184
    %v187 = vmul.f32 %v186, %v184
    %v188 = vmul.f32 %v187, %v186
    %v189 = vmul.f32 0.5, %v188
    %v190 = vsub.f32 1.5, %v189
    %v191 = vmul.f32 %v186, %v190
    %vm192 = vweird.f32 %v184
    %vm193 = vweird.f32 %v186
    %vm194 = vmor %vm192, %vm193
    %v195 = vsel %vm194, %v186, %v191
    %v196 = vrsqrt.pop %v185
    %v197 = vmul.f32 %v196, %v185
    %v198 = vmul.f32 %v197, %v196
    %v199 = vmul.f32 0.5, %v198
    %v200 = vsub.f32 1.5, %v199
    %v201 = vmul.f32 %v196, %v200
    %vm202 = vweird.f32 %v185
    %vm203 = vweird.f32 %v196
    %vm204 = vmor %vm202, %vm203
    %v205 = vsel %vm204, %v196, %v201
    %v206 = vmul.f32 %v155, %v195
    %v207 = vmul.f32 %v156, %v205
    %v209 = vperm.slane %v165, 0
    %v211 = vmul.f32 %v206, %v209
    %v212 = vmul.f32 %v207, %v209
    %v213 = vld [vmem:[#allocation10] sm:$0xf]
    %v214 = vld [vmem:[#allocation10 + $0x4] sm:$0xf]
    %v215 = vld [vmem:[#allocation10 + $0x8] sm:$0xf]
    %v216 = vld [vmem:[#allocation10 + $0xc] sm:$0xf]
    %v217 = vpack.c.bf16 %v212, %v211
    %v222 = vunpack.c.l.b16 %v213
    %v223 = vunpack.c.l.b16 %v214
    %v224 = vunpack.c.l.b16 %v215
    %v225 = vunpack.c.l.b16 %v216
    %v226 = vpack.c.b16 %v223, %v222
    %v227 = vpack.c.b16 %v225, %v224
    %v231 = vsel %vm168, %v217, 0
    %233 = vmatpush.bf16.msra.mxu0 0
    %234 = vmatpush.bf16.msra.mxu0 0
    %235 = vmatpush.bf16.msra.mxu0 0
    %236 = vmatpush.bf16.msra.mxu0 0
    %237 = vmatpush.bf16.msra.mxu0 0
    %238 = vmatpush.bf16.msra.mxu0 0
    %239 = vmatpush.bf16.msra.mxu0 %v227
    %240 = vmatpush.bf16.msra.mxu0 %v226
    %241 = vmatmul.bf16.gmra.mxu0 %v231
    %v242 = vpop.f32.mrf.mxu0
    %v243 = vadd.f32 0.0, %v242
    %v244 = vpop.f32.mrf.mxu0
    %v245 = vadd.f32 0.0, %v244
    %246 = vdwg.mxu0
    %v247 = vmul.f32 %v243, %v157
    %v248 = vmul.f32 %v245, %v158
    %251 = vrot.lane.b32.xlu0 %v159, 32
    %v252 = vpop.permute.xlu0 %251
    %253 = vrot.lane.b32.xlu0 %v160, 32
    %v254 = vpop.permute.xlu0 %253
    %v257 = vmul.f32 %v243, %v252
    %v258 = vmul.f32 %v245, %v254
    %261 = vrot.lane.b32.xlu0 %v257, 96
    %v262 = vpop.permute.xlu0 %261
    %263 = vrot.lane.b32.xlu0 %v258, 96
    %v264 = vpop.permute.xlu0 %263
    %v267 = vadd.f32 %v247, %v262
    %v268 = vadd.f32 %v248, %v264
    %v269 = vpack.c.bf16 %v267, %v267
    %v270 = vpack.c.bf16 %v268, %v268
    %v271 = vpack.c.bf16 %v243, %v243
    %v272 = vpack.c.bf16 %v245, %v245
    %v273 = vld [vmem:[%s1] sm:$0xf]
    %v274 = vld [vmem:[%s1 + $0x4] sm:$0xf]
    %v275 = vld [vmem:[%s1 + $0x8] sm:$0xf]
    %v276 = vld [vmem:[%s1 + $0xc] sm:$0xf]
    %v277 = vld [vmem:[%s1 + $0x10] sm:$0xf]
    %v278 = vld [vmem:[%s1 + $0x14] sm:$0xf]
    %v279 = vld [vmem:[%s1 + $0x18] sm:$0xf]
    %v280 = vld [vmem:[%s1 + $0x1c] sm:$0xf]
    %v285 = vunpack.c.l.b16 %v273
    %v286 = vunpack.c.l.b16 %v274
    %v287 = vunpack.c.l.b16 %v275
    %v288 = vunpack.c.l.b16 %v276
    %v289 = vpack.c.b16 %v286, %v285
    %v290 = vpack.c.b16 %v288, %v287
    %v292 = vsel %vm168, %v289, 0
    %v295 = vsel %vm168, %v290, 0
    %v298 = vsel %vm168, %v269, 0
    %300 = vmatpush.bf16.xpose.msra.mxu0 0
    %301 = vmatpush.bf16.xpose.msra.mxu0 0
    %302 = vmatpush.bf16.xpose.msra.mxu0 0
    %303 = vmatpush.bf16.xpose.msra.mxu0 0
    %304 = vmatpush.bf16.xpose.msra.mxu0 0
    %305 = vmatpush.bf16.xpose.msra.mxu0 0
    %306 = vmatpush.bf16.xpose.msra.mxu0 0
    %307 = vmatpush.bf16.xpose.msra.mxu0 %v298
    %308 = vmatmul.bf16.gmra.mxu0 %v292
    %v309 = vpop.f32.mrf.mxu0
    %v310 = vadd.f32 0.0, %v309
    %v311 = vpop.f32.mrf.mxu0
    %v312 = vadd.f32 0.0, %v311
    %313 = vmatmul.bf16.gmra.mxu0 %v295
    %v314 = vpop.f32.mrf.mxu0
    %v315 = vadd.f32 0.0, %v314
    %v316 = vpop.f32.mrf.mxu0
    %v317 = vadd.f32 0.0, %v316
    %318 = vdwg.mxu0
    %v323 = vunpack.c.l.b16 %v277
    %v324 = vunpack.c.l.b16 %v278
    %v325 = vunpack.c.l.b16 %v279
    %v326 = vunpack.c.l.b16 %v280
    %v327 = vpack.c.b16 %v324, %v323
    %v328 = vpack.c.b16 %v326, %v325
    %v330 = vsel %vm168, %v327, 0
    %v333 = vsel %vm168, %v328, 0
    %v336 = vsel %vm168, %v270, 0
    %338 = vmatpush.bf16.xpose.msra.mxu0 0
    %339 = vmatpush.bf16.xpose.msra.mxu0 0
    %340 = vmatpush.bf16.xpose.msra.mxu0 0
    %341 = vmatpush.bf16.xpose.msra.mxu0 0
    %342 = vmatpush.bf16.xpose.msra.mxu0 0
    %343 = vmatpush.bf16.xpose.msra.mxu0 0
    %344 = vmatpush.bf16.xpose.msra.mxu0 0
    %345 = vmatpush.bf16.xpose.msra.mxu0 %v336
    %346 = vmatmul.bf16.gmra.mxu0 %v330
    %v347 = vpop.f32.mrf.mxu0
    %v348 = vadd.f32 0.0, %v347
    %v349 = vpop.f32.mrf.mxu0
    %v350 = vadd.f32 0.0, %v349
    %351 = vmatmul.bf16.gmra.mxu0 %v333
    %v352 = vpop.f32.mrf.mxu0
    %v353 = vadd.f32 0.0, %v352
    %v354 = vpop.f32.mrf.mxu0
    %v355 = vadd.f32 0.0, %v354
    %356 = vdwg.mxu0
    %vm357 = vcmask 64512
    %v358 = vsel %vm357, %v310, -inf
    %359 = vmax.xlane.f32.xlu0 %v358
    %v360 = vpop.xlane.xlu0 %359
    %v361 = vsel %vm357, %v312, -inf
    %362 = vmax.xlane.f32.xlu0 %v361
    %v363 = vpop.xlane.xlu0 %362
    %v364 = vsel %vm357, %v315, -inf
    %365 = vmax.xlane.f32.xlu0 %v364
    %v366 = vpop.xlane.xlu0 %365
    %v367 = vsel %vm357, %v317, -inf
    %368 = vmax.xlane.f32.xlu0 %v367
    %v369 = vpop.xlane.xlu0 %368
    %v370 = vsel %vm357, %v348, -inf
    %371 = vmax.xlane.f32.xlu0 %v370
    %v372 = vpop.xlane.xlu0 %371
    %v373 = vsel %vm357, %v350, -inf
    %374 = vmax.xlane.f32.xlu0 %v373
    %v375 = vpop.xlane.xlu0 %374
    %v376 = vsel %vm357, %v353, -inf
    %377 = vmax.xlane.f32.xlu0 %v376
    %v378 = vpop.xlane.xlu0 %377
    %v379 = vsel %vm357, %v355, -inf
    %380 = vmax.xlane.f32.xlu0 %v379
    %v381 = vpop.xlane.xlu0 %380
    %v382 = vsub.f32 %v310, %v360
    %v383 = vsub.f32 %v312, %v363
    %v384 = vsub.f32 %v315, %v366
    %v385 = vsub.f32 %v317, %v369
    %v386 = vsub.f32 %v348, %v372
    %v387 = vsub.f32 %v350, %v375
    %v388 = vsub.f32 %v353, %v378
    %v389 = vsub.f32 %v355, %v381
    %v390 = vmul.f32 %v382, 1.442695
    %v391 = vpow.pop %v390
    %v392 = vmul.f32 %v383, 1.442695
    %v393 = vpow.pop %v392
    %v394 = vmul.f32 %v384, 1.442695
    %v395 = vpow.pop %v394
    %v396 = vmul.f32 %v385, 1.442695
    %v397 = vpow.pop %v396
    %v398 = vmul.f32 %v386, 1.442695
    %v399 = vpow.pop %v398
    %v400 = vmul.f32 %v387, 1.442695
    %v401 = vpow.pop %v400
    %v402 = vmul.f32 %v388, 1.442695
    %v403 = vpow.pop %v402
    %v404 = vmul.f32 %v389, 1.442695
    %v405 = vpow.pop %v404
    %v406 = vsel %vm357, %v391, 0.0
    %407 = vadd.xlane.f32.xlu0 %v406
    %v408 = vpop.xlane.xlu0 %407
    %v409 = vsel %vm357, %v393, 0.0
    %410 = vadd.xlane.f32.xlu0 %v409
    %v411 = vpop.xlane.xlu0 %410
    %v412 = vsel %vm357, %v395, 0.0
    %413 = vadd.xlane.f32.xlu0 %v412
    %v414 = vpop.xlane.xlu0 %413
    %v415 = vsel %vm357, %v397, 0.0
    %416 = vadd.xlane.f32.xlu0 %v415
    %v417 = vpop.xlane.xlu0 %416
    %v418 = vsel %vm357, %v399, 0.0
    %419 = vadd.xlane.f32.xlu0 %v418
    %v420 = vpop.xlane.xlu0 %419
    %v421 = vsel %vm357, %v401, 0.0
    %422 = vadd.xlane.f32.xlu0 %v421
    %v423 = vpop.xlane.xlu0 %422
    %v424 = vsel %vm357, %v403, 0.0
    %425 = vadd.xlane.f32.xlu0 %v424
    %v426 = vpop.xlane.xlu0 %425
    %v427 = vsel %vm357, %v405, 0.0
    %428 = vadd.xlane.f32.xlu0 %v427
    %v429 = vpop.xlane.xlu0 %428
    %v430 = vrcp.pop %v408
    %v431 = vrcp.pop %v411
    %v432 = vrcp.pop %v414
    %v433 = vrcp.pop %v417
    %v434 = vrcp.pop %v420
    %v435 = vrcp.pop %v423
    %v436 = vrcp.pop %v426
    %v437 = vrcp.pop %v429
    %v438 = vmul.f32 %v391, %v430
    %v439 = vmul.f32 %v393, %v431
    %v440 = vmul.f32 %v395, %v432
    %v441 = vmul.f32 %v397, %v433
    %v442 = vmul.f32 %v399, %v434
    %v443 = vmul.f32 %v401, %v435
    %v444 = vmul.f32 %v403, %v436
    %v445 = vmul.f32 %v405, %v437
    %v446 = vpack.c.bf16 %v438, %v438
    %v447 = vpack.c.bf16 %v439, %v439
    %v448 = vpack.c.bf16 %v440, %v440
    %v449 = vpack.c.bf16 %v441, %v441
    %v450 = vpack.c.bf16 %v442, %v442
    %v451 = vpack.c.bf16 %v443, %v443
    %v452 = vpack.c.bf16 %v444, %v444
    %v453 = vpack.c.bf16 %v445, %v445
    %v458 = vunpack.c.l.b16 %v446
    %v459 = vunpack.c.l.b16 %v447
    %v460 = vunpack.c.l.b16 %v448
    %v461 = vunpack.c.l.b16 %v449
    %v462 = vpack.c.b16 %v459, %v458
    %v463 = vpack.c.b16 %v461, %v460
    %v465 = vunpack.c.l.b16 %v271
    %v466 = vpack.c.b16 %v465, %v465
    %467 = vrot.lane.b32.xlu0 %v466, 64
    %v468 = vpop.permute.xlu0 %467
    %v470 = vsel %vm357, %v462, 0
    %v473 = vsel %vm357, %v463, 0
    %vm475 = vcmask 1043456
    %v477 = vsel %vm475, %v468, 0
    %479 = vmatpush.bf16.msra.mxu0 0
    %480 = vmatpush.bf16.msra.mxu0 0
    %481 = vmatpush.bf16.msra.mxu0 0
    %482 = vmatpush.bf16.msra.mxu0 0
    %483 = vmatpush.bf16.msra.mxu0 0
    %484 = vmatpush.bf16.msra.mxu0 0
    %485 = vmatpush.bf16.msra.mxu0 0
    %486 = vmatpush.bf16.msra.mxu0 %v477
    %487 = vmatmul.bf16.gmra.mxu0 %v470
    %v488 = vpop.f32.mrf.mxu0
    %v489 = vadd.f32 0.0, %v488
    %v490 = vpop.f32.mrf.mxu0
    %v491 = vadd.f32 0.0, %v490
    %492 = vmatmul.bf16.gmra.mxu0 %v473
    %v493 = vpop.f32.mrf.mxu0
    %v494 = vadd.f32 0.0, %v493
    %v495 = vpop.f32.mrf.mxu0
    %v496 = vadd.f32 0.0, %v495
    %497 = vdwg.mxu0
    %v502 = vunpack.c.l.b16 %v450
    %v503 = vunpack.c.l.b16 %v451
    %v504 = vunpack.c.l.b16 %v452
    %v505 = vunpack.c.l.b16 %v453
    %v506 = vpack.c.b16 %v503, %v502
    %v507 = vpack.c.b16 %v505, %v504
    %v509 = vunpack.c.l.b16 %v272
    %v510 = vpack.c.b16 %v509, %v509
    %511 = vrot.lane.b32.xlu0 %v510, 64
    %v512 = vpop.permute.xlu0 %511
    %v514 = vsel %vm357, %v506, 0
    %v517 = vsel %vm357, %v507, 0
    %v520 = vsel %vm475, %v512, 0
    %522 = vmatpush.bf16.msra.mxu0 0
    %523 = vmatpush.bf16.msra.mxu0 0
    %524 = vmatpush.bf16.msra.mxu0 0
    %525 = vmatpush.bf16.msra.mxu0 0
    %526 = vmatpush.bf16.msra.mxu0 0
    %527 = vmatpush.bf16.msra.mxu0 0
    %528 = vmatpush.bf16.msra.mxu0 0
    %529 = vmatpush.bf16.msra.mxu0 %v520
    %530 = vmatmul.bf16.gmra.mxu0 %v514
    %v531 = vpop.f32.mrf.mxu0
    %v532 = vadd.f32 0.0, %v531
    %v533 = vpop.f32.mrf.mxu0
    %v534 = vadd.f32 0.0, %v533
    %535 = vmatmul.bf16.gmra.mxu0 %v517
    %v536 = vpop.f32.mrf.mxu0
    %v537 = vadd.f32 0.0, %v536
    %v538 = vpop.f32.mrf.mxu0
    %v539 = vadd.f32 0.0, %v538
    %540 = vdwg.mxu0
    %v541 = vmul.f32 %v489, %v161
    %v542 = vmul.f32 %v491, %v162
    %v543 = vmul.f32 %v494, %v163
    %v544 = vmul.f32 %v496, %v164
    %v545 = vmul.f32 %v532, %v161
    %v546 = vmul.f32 %v534, %v162
    %v547 = vmul.f32 %v537, %v163
    %v548 = vmul.f32 %v539, %v164
    %v549 = vadd.f32 %v541, %v542
    %v550 = vadd.f32 %v545, %v546
    %v551 = vadd.f32 %v549, %v543
    %v552 = vadd.f32 %v550, %v547
    %v553 = vadd.f32 %v551, %v544
    %v554 = vadd.f32 %v552, %v548
    %v555 = vld [vmem:[#allocation11] sm:$0xf]
    %v556 = vld [vmem:[#allocation11 + $0x4] sm:$0xf]
    %v557 = vld [vmem:[#allocation11 + $0x8] sm:$0xf]
    %v558 = vld [vmem:[#allocation11 + $0xc] sm:$0xf]
    %v559 = vpack.c.bf16 %v554, %v553
    %v564 = vunpack.c.l.b16 %v555
    %v565 = vunpack.c.l.b16 %v556
    %v566 = vunpack.c.l.b16 %v557
    %v567 = vunpack.c.l.b16 %v558
    %v568 = vpack.c.b16 %v565, %v564
    %v569 = vpack.c.b16 %v567, %v566
    %v573 = vsel %vm168, %v559, 0
    %575 = vmatpush.bf16.msra.mxu0 0
    %576 = vmatpush.bf16.msra.mxu0 0
    %577 = vmatpush.bf16.msra.mxu0 0
    %578 = vmatpush.bf16.msra.mxu0 0
    %579 = vmatpush.bf16.msra.mxu0 0
    %580 = vmatpush.bf16.msra.mxu0 0
    %581 = vmatpush.bf16.msra.mxu0 %v569
    %582 = vmatpush.bf16.msra.mxu0 %v568
    %583 = vmatmul.bf16.gmra.mxu0 %v573
    %v584 = vpop.f32.mrf.mxu0
    %v585 = vadd.f32 0.0, %v584
    %v586 = vpop.f32.mrf.mxu0
    %v587 = vadd.f32 0.0, %v586
    %588 = vdwg.mxu0
    %v589 = vadd.f32 %v155, %v585
    %v590 = vadd.f32 %v156, %v587
    %v591 = vld [vmem:[%s6] sm:$0x1]
    %v592 = vmul.f32 %v589, %v589
    %v593 = vmul.f32 %v590, %v590
    %v594 = vsel %vm168, %v592, 0.0
    %595 = vadd.xlane.f32.xlu0 %v594
    %v596 = vpop.xlane.xlu0 %595
    %v597 = vsel %vm168, %v593, 0.0
    %598 = vadd.xlane.f32.xlu0 %v597
    %v599 = vpop.xlane.xlu0 %598
    %v600 = vmul.f32 %v596, %v181
    %v601 = vmul.f32 %v599, %v181
    %v602 = vadd.f32 %v600, 1e-05
    %v603 = vadd.f32 %v601, 1e-05
    %v604 = vrsqrt.pop %v602
    %v605 = vmul.f32 %v604, %v602
    %v606 = vmul.f32 %v605, %v604
    %v607 = vmul.f32 0.5, %v606
    %v608 = vsub.f32 1.5, %v607
    %v609 = vmul.f32 %v604, %v608
    %vm610 = vweird.f32 %v602
    %vm611 = vweird.f32 %v604
    %vm612 = vmor %vm610, %vm611
    %v613 = vsel %vm612, %v604, %v609
    %v614 = vrsqrt.pop %v603
    %v615 = vmul.f32 %v614, %v603
    %v616 = vmul.f32 %v615, %v614
    %v617 = vmul.f32 0.5, %v616
    %v618 = vsub.f32 1.5, %v617
    %v619 = vmul.f32 %v614, %v618
    %vm620 = vweird.f32 %v603
    %vm621 = vweird.f32 %v614
    %vm622 = vmor %vm620, %vm621
    %v623 = vsel %vm622, %v614, %v619
    %v624 = vmul.f32 %v589, %v613
    %v625 = vmul.f32 %v590, %v623
    %v627 = vperm.slane %v591, 0
    %v629 = vmul.f32 %v624, %v627
    %v630 = vmul.f32 %v625, %v627
    %v631 = vld [vmem:[%s9] sm:$0xff]
    %v632 = vld [vmem:[%s9 + $0x8] sm:$0xff]
    %v633 = vld [vmem:[%s9 + $0x10] sm:$0xff]
    %v634 = vld [vmem:[%s9 + $0x18] sm:$0xff]
    %v635 = vpack.c.bf16 %v630, %v629
    %v640 = vunpack.c.l.b16 %v631
    %v641 = vunpack.c.h.b16 %v631
    %v642 = vunpack.c.l.b16 %v632
    %v643 = vunpack.c.h.b16 %v632
    %v644 = vunpack.c.l.b16 %v633
    %v645 = vunpack.c.h.b16 %v633
    %v646 = vunpack.c.l.b16 %v634
    %v647 = vunpack.c.h.b16 %v634
    %v648 = vpack.c.b16 %v642, %v640
    %v649 = vpack.c.b16 %v643, %v641
    %v650 = vpack.c.b16 %v646, %v644
    %v651 = vpack.c.b16 %v647, %v645
    %v657 = vsel %vm168, %v635, 0
    %659 = vmatpush.bf16.msra.mxu0 0
    %660 = vmatpush.bf16.msra.mxu0 0
    %661 = vmatpush.bf16.msra.mxu0 0
    %662 = vmatpush.bf16.msra.mxu0 0
    %663 = vmatpush.bf16.msra.mxu0 0
    %664 = vmatpush.bf16.msra.mxu0 0
    %665 = vmatpush.bf16.msra.mxu0 %v650
    %666 = vmatpush.bf16.msra.mxu0 %v648
    %667 = vmatmul.bf16.gmra.mxu0 %v657
    %v668 = vpop.f32.mrf.mxu0
    %v669 = vadd.f32 0.0, %v668
    %v670 = vpop.f32.mrf.mxu0
    %v671 = vadd.f32 0.0, %v670
    %672 = vdwg.mxu0
    %673 = vmatpush.bf16.msra.mxu0 0
    %674 = vmatpush.bf16.msra.mxu0 0
    %675 = vmatpush.bf16.msra.mxu0 0
    %676 = vmatpush.bf16.msra.mxu0 0
    %677 = vmatpush.bf16.msra.mxu0 0
    %678 = vmatpush.bf16.msra.mxu0 0
    %679 = vmatpush.bf16.msra.mxu0 %v651
    %680 = vmatpush.bf16.msra.mxu0 %v649
    %681 = vmatmul.bf16.gmra.mxu0 %v657
    %v682 = vpop.f32.mrf.mxu0
    %v683 = vadd.f32 0.0, %v682
    %v684 = vpop.f32.mrf.mxu0
    %v685 = vadd.f32 0.0, %v684
    %686 = vdwg.mxu0
    %v687 = vsub.f32 0.0, %v669
    %v688 = vsub.f32 0.0, %v671
    %v689 = vmul.f32 %v687, 1.442695
    %v690 = vpow.pop %v689
    %v691 = vmul.f32 %v688, 1.442695
    %v692 = vpow.pop %v691
    %v693 = vadd.f32 %v690, 1.0
    %v694 = vadd.f32 %v692, 1.0
    %v695 = vrcp.pop %v693
    %v696 = vrcp.pop %v694
    %v697 = vmul.f32 %v669, %v695
    %v698 = vmul.f32 %v671, %v696
    %703 = vrot.lane.b32.xlu0 %v669, 32
    %v704 = vpop.permute.xlu0 %703
    %705 = vrot.lane.b32.xlu0 %v683, 32
    %v706 = vpop.permute.xlu0 %705
    %707 = vrot.lane.b32.xlu0 %v671, 32
    %v708 = vpop.permute.xlu0 %707
    %709 = vrot.lane.b32.xlu0 %v685, 32
    %v710 = vpop.permute.xlu0 %709
    %v711 = vsel %vm168, %v704, %v706
    %v712 = vsel %vm168, %v708, %v710
    %v715 = vmul.f32 %v697, %v711
    %v716 = vmul.f32 %v698, %v712
    %v717 = vld [vmem:[%s10] sm:$0xf]
    %v718 = vld [vmem:[%s10 + $0x4] sm:$0xf]
    %v719 = vld [vmem:[%s10 + $0x8] sm:$0xf]
    %v720 = vld [vmem:[%s10 + $0xc] sm:$0xf]
    %v721 = vld [vmem:[%s10 + $0x10] sm:$0xf]
    %v722 = vld [vmem:[%s10 + $0x14] sm:$0xf]
    %v723 = vld [vmem:[%s10 + $0x18] sm:$0xf]
    %v724 = vld [vmem:[%s10 + $0x1c] sm:$0xf]
    %v725 = vld [vmem:[%s10 + $0x20] sm:$0xf]
    %v726 = vld [vmem:[%s10 + $0x24] sm:$0xf]
    %v727 = vld [vmem:[%s10 + $0x28] sm:$0xf]
    %v728 = vld [vmem:[%s10 + $0x2c] sm:$0xf]
    %v729 = vpack.c.bf16 %v716, %v715
    %v742 = vunpack.c.l.b16 %v717
    %v743 = vunpack.c.l.b16 %v718
    %v744 = vunpack.c.l.b16 %v719
    %v745 = vunpack.c.l.b16 %v720
    %v746 = vunpack.c.l.b16 %v721
    %v747 = vunpack.c.l.b16 %v722
    %v748 = vunpack.c.l.b16 %v723
    %v749 = vunpack.c.l.b16 %v724
    %v750 = vunpack.c.l.b16 %v725
    %v751 = vunpack.c.l.b16 %v726
    %v752 = vunpack.c.l.b16 %v727
    %v753 = vunpack.c.l.b16 %v728
    %v754 = vpack.c.b16 %v743, %v742
    %v755 = vpack.c.b16 %v745, %v744
    %v756 = vpack.c.b16 %v747, %v746
    %v757 = vpack.c.b16 %v749, %v748
    %v758 = vpack.c.b16 %v751, %v750
    %v759 = vpack.c.b16 %v753, %v752
    %vm766 = vcmask 785408
    %v768 = vsel %vm766, %v729, 0
    %770 = vmatpush.bf16.msra.mxu0 0
    %771 = vmatpush.bf16.msra.mxu0 0
    %772 = vmatpush.bf16.msra.mxu0 %v759
    %773 = vmatpush.bf16.msra.mxu0 %v758
    %774 = vmatpush.bf16.msra.mxu0 %v757
    %775 = vmatpush.bf16.msra.mxu0 %v756
    %776 = vmatpush.bf16.msra.mxu0 %v755
    %777 = vmatpush.bf16.msra.mxu0 %v754
    %778 = vmatmul.bf16.gmra.mxu0 %v768
    %v779 = vpop.f32.mrf.mxu0
    %v780 = vadd.f32 0.0, %v779
    %v781 = vpop.f32.mrf.mxu0
    %v782 = vadd.f32 0.0, %v781
    %783 = vdwg.mxu0
    %v784 = vadd.f32 %v589, %v780
    %v785 = vadd.f32 %v590, %v782
    %s786 = scalar_lea.vmem %s5, 1
    %v787 = vld [vmem:[%s786] sm:$0x1]
    %v788 = vmul.f32 %v784, %v784
    %v789 = vmul.f32 %v785, %v785
    %v790 = vsel %vm168, %v788, 0.0
    %791 = vadd.xlane.f32.xlu0 %v790
    %v792 = vpop.xlane.xlu0 %791
    %v793 = vsel %vm168, %v789, 0.0
    %794 = vadd.xlane.f32.xlu0 %v793
    %v795 = vpop.xlane.xlu0 %794
    %v796 = vmul.f32 %v792, %v181
    %v797 = vmul.f32 %v795, %v181
    %v798 = vadd.f32 %v796, 1e-05
    %v799 = vadd.f32 %v797, 1e-05
    %v800 = vrsqrt.pop %v798
    %v801 = vmul.f32 %v800, %v798
    %v802 = vmul.f32 %v801, %v800
    %v803 = vmul.f32 0.5, %v802
    %v804 = vsub.f32 1.5, %v803
    %v805 = vmul.f32 %v800, %v804
    %vm806 = vweird.f32 %v798
    %vm807 = vweird.f32 %v800
    %vm808 = vmor %vm806, %vm807
    %v809 = vsel %vm808, %v800, %v805
    %v810 = vrsqrt.pop %v799
    %v811 = vmul.f32 %v810, %v799
    %v812 = vmul.f32 %v811, %v810
    %v813 = vmul.f32 0.5, %v812
    %v814 = vsub.f32 1.5, %v813
    %v815 = vmul.f32 %v810, %v814
    %vm816 = vweird.f32 %v799
    %vm817 = vweird.f32 %v810
    %vm818 = vmor %vm816, %vm817
    %v819 = vsel %vm818, %v810, %v815
    %v820 = vmul.f32 %v784, %v809
    %v821 = vmul.f32 %v785, %v819
    %v823 = vperm.slane %v787, 0
    %v825 = vmul.f32 %v820, %v823
    %v826 = vmul.f32 %v821, %v823
    %s827 = scalar_lea.vmem [#allocation10], 16
    %v828 = vld [vmem:[%s827] sm:$0xf]
    %v829 = vld [vmem:[%s827 + $0x4] sm:$0xf]
    %v830 = vld [vmem:[%s827 + $0x8] sm:$0xf]
    %v831 = vld [vmem:[%s827 + $0xc] sm:$0xf]
    %v832 = vpack.c.bf16 %v826, %v825
    %v837 = vunpack.c.l.b16 %v828
    %v838 = vunpack.c.l.b16 %v829
    %v839 = vunpack.c.l.b16 %v830
    %v840 = vunpack.c.l.b16 %v831
    %v841 = vpack.c.b16 %v838, %v837
    %v842 = vpack.c.b16 %v840, %v839
    %v846 = vsel %vm168, %v832, 0
    %848 = vmatpush.bf16.msra.mxu0 0
    %849 = vmatpush.bf16.msra.mxu0 0
    %850 = vmatpush.bf16.msra.mxu0 0
    %851 = vmatpush.bf16.msra.mxu0 0
    %852 = vmatpush.bf16.msra.mxu0 0
    %853 = vmatpush.bf16.msra.mxu0 0
    %854 = vmatpush.bf16.msra.mxu0 %v842
    %855 = vmatpush.bf16.msra.mxu0 %v841
    %856 = vmatmul.bf16.gmra.mxu0 %v846
    %v857 = vpop.f32.mrf.mxu0
    %v858 = vadd.f32 0.0, %v857
    %v859 = vpop.f32.mrf.mxu0
    %v860 = vadd.f32 0.0, %v859
    %861 = vdwg.mxu0
    %v862 = vmul.f32 %v858, %v157
    %v863 = vmul.f32 %v860, %v158
    %v864 = vmul.f32 %v858, %v252
    %v865 = vmul.f32 %v860, %v254
    %868 = vrot.lane.b32.xlu0 %v864, 96
    %v869 = vpop.permute.xlu0 %868
    %870 = vrot.lane.b32.xlu0 %v865, 96
    %v871 = vpop.permute.xlu0 %870
    %v874 = vadd.f32 %v862, %v869
    %v875 = vadd.f32 %v863, %v871
    %v876 = vpack.c.bf16 %v874, %v874
    %v877 = vpack.c.bf16 %v875, %v875
    %v878 = vpack.c.bf16 %v858, %v858
    %v879 = vpack.c.bf16 %v860, %v860
    %s880 = scalar_lea.vmem %s1, 32
    %v881 = vld [vmem:[%s880] sm:$0xf]
    %v882 = vld [vmem:[%s880 + $0x4] sm:$0xf]
    %v883 = vld [vmem:[%s880 + $0x8] sm:$0xf]
    %v884 = vld [vmem:[%s880 + $0xc] sm:$0xf]
    %v885 = vld [vmem:[%s880 + $0x10] sm:$0xf]
    %v886 = vld [vmem:[%s880 + $0x14] sm:$0xf]
    %v887 = vld [vmem:[%s880 + $0x18] sm:$0xf]
    %v888 = vld [vmem:[%s880 + $0x1c] sm:$0xf]
    %v893 = vunpack.c.l.b16 %v881
    %v894 = vunpack.c.l.b16 %v882
    %v895 = vunpack.c.l.b16 %v883
    %v896 = vunpack.c.l.b16 %v884
    %v897 = vpack.c.b16 %v894, %v893
    %v898 = vpack.c.b16 %v896, %v895
    %v900 = vsel %vm168, %v897, 0
    %v903 = vsel %vm168, %v898, 0
    %v906 = vsel %vm168, %v876, 0
    %908 = vmatpush.bf16.xpose.msra.mxu0 0
    %909 = vmatpush.bf16.xpose.msra.mxu0 0
    %910 = vmatpush.bf16.xpose.msra.mxu0 0
    %911 = vmatpush.bf16.xpose.msra.mxu0 0
    %912 = vmatpush.bf16.xpose.msra.mxu0 0
    %913 = vmatpush.bf16.xpose.msra.mxu0 0
    %914 = vmatpush.bf16.xpose.msra.mxu0 0
    %915 = vmatpush.bf16.xpose.msra.mxu0 %v906
    %916 = vmatmul.bf16.gmra.mxu0 %v900
    %v917 = vpop.f32.mrf.mxu0
    %v918 = vadd.f32 0.0, %v917
    %v919 = vpop.f32.mrf.mxu0
    %v920 = vadd.f32 0.0, %v919
    %921 = vmatmul.bf16.gmra.mxu0 %v903
    %v922 = vpop.f32.mrf.mxu0
    %v923 = vadd.f32 0.0, %v922
    %v924 = vpop.f32.mrf.mxu0
    %v925 = vadd.f32 0.0, %v924
    %926 = vdwg.mxu0
    %v931 = vunpack.c.l.b16 %v885
    %v932 = vunpack.c.l.b16 %v886
    %v933 = vunpack.c.l.b16 %v887
    %v934 = vunpack.c.l.b16 %v888
    %v935 = vpack.c.b16 %v932, %v931
    %v936 = vpack.c.b16 %v934, %v933
    %v938 = vsel %vm168, %v935, 0
    %v941 = vsel %vm168, %v936, 0
    %v944 = vsel %vm168, %v877, 0
    %946 = vmatpush.bf16.xpose.msra.mxu0 0
    %947 = vmatpush.bf16.xpose.msra.mxu0 0
    %948 = vmatpush.bf16.xpose.msra.mxu0 0
    %949 = vmatpush.bf16.xpose.msra.mxu0 0
    %950 = vmatpush.bf16.xpose.msra.mxu0 0
    %951 = vmatpush.bf16.xpose.msra.mxu0 0
    %952 = vmatpush.bf16.xpose.msra.mxu0 0
    %953 = vmatpush.bf16.xpose.msra.mxu0 %v944
    %954 = vmatmul.bf16.gmra.mxu0 %v938
    %v955 = vpop.f32.mrf.mxu0
    %v956 = vadd.f32 0.0, %v955
    %v957 = vpop.f32.mrf.mxu0
    %v958 = vadd.f32 0.0, %v957
    %959 = vmatmul.bf16.gmra.mxu0 %v941
    %v960 = vpop.f32.mrf.mxu0
    %v961 = vadd.f32 0.0, %v960
    %v962 = vpop.f32.mrf.mxu0
    %v963 = vadd.f32 0.0, %v962
    %964 = vdwg.mxu0
    %v965 = vsel %vm357, %v918, -inf
    %966 = vmax.xlane.f32.xlu0 %v965
    %v967 = vpop.xlane.xlu0 %966
    %v968 = vsel %vm357, %v920, -inf
    %969 = vmax.xlane.f32.xlu0 %v968
    %v970 = vpop.xlane.xlu0 %969
    %v971 = vsel %vm357, %v923, -inf
    %972 = vmax.xlane.f32.xlu0 %v971
    %v973 = vpop.xlane.xlu0 %972
    %v974 = vsel %vm357, %v925, -inf
    %975 = vmax.xlane.f32.xlu0 %v974
    %v976 = vpop.xlane.xlu0 %975
    %v977 = vsel %vm357, %v956, -inf
    %978 = vmax.xlane.f32.xlu0 %v977
    %v979 = vpop.xlane.xlu0 %978
    %v980 = vsel %vm357, %v958, -inf
    %981 = vmax.xlane.f32.xlu0 %v980
    %v982 = vpop.xlane.xlu0 %981
    %v983 = vsel %vm357, %v961, -inf
    %984 = vmax.xlane.f32.xlu0 %v983
    %v985 = vpop.xlane.xlu0 %984
    %v986 = vsel %vm357, %v963, -inf
    %987 = vmax.xlane.f32.xlu0 %v986
    %v988 = vpop.xlane.xlu0 %987
    %v989 = vsub.f32 %v918, %v967
    %v990 = vsub.f32 %v920, %v970
    %v991 = vsub.f32 %v923, %v973
    %v992 = vsub.f32 %v925, %v976
    %v993 = vsub.f32 %v956, %v979
    %v994 = vsub.f32 %v958, %v982
    %v995 = vsub.f32 %v961, %v985
    %v996 = vsub.f32 %v963, %v988
    %v997 = vmul.f32 %v989, 1.442695
    %v998 = vpow.pop %v997
    %v999 = vmul.f32 %v990, 1.442695
    %v1000 = vpow.pop %v999
    %v1001 = vmul.f32 %v991, 1.442695
    %v1002 = vpow.pop %v1001
    %v1003 = vmul.f32 %v992, 1.442695
    %v1004 = vpow.pop %v1003
    %v1005 = vmul.f32 %v993, 1.442695
    %v1006 = vpow.pop %v1005
    %v1007 = vmul.f32 %v994, 1.442695
    %v1008 = vpow.pop %v1007
    %v1009 = vmul.f32 %v995, 1.442695
    %v1010 = vpow.pop %v1009
    %v1011 = vmul.f32 %v996, 1.442695
    %v1012 = vpow.pop %v1011
    %v1013 = vsel %vm357, %v998, 0.0
    %1014 = vadd.xlane.f32.xlu0 %v1013
    %v1015 = vpop.xlane.xlu0 %1014
    %v1016 = vsel %vm357, %v1000, 0.0
    %1017 = vadd.xlane.f32.xlu0 %v1016
    %v1018 = vpop.xlane.xlu0 %1017
    %v1019 = vsel %vm357, %v1002, 0.0
    %1020 = vadd.xlane.f32.xlu0 %v1019
    %v1021 = vpop.xlane.xlu0 %1020
    %v1022 = vsel %vm357, %v1004, 0.0
    %1023 = vadd.xlane.f32.xlu0 %v1022
    %v1024 = vpop.xlane.xlu0 %1023
    %v1025 = vsel %vm357, %v1006, 0.0
    %1026 = vadd.xlane.f32.xlu0 %v1025
    %v1027 = vpop.xlane.xlu0 %1026
    %v1028 = vsel %vm357, %v1008, 0.0
    %1029 = vadd.xlane.f32.xlu0 %v1028
    %v1030 = vpop.xlane.xlu0 %1029
    %v1031 = vsel %vm357, %v1010, 0.0
    %1032 = vadd.xlane.f32.xlu0 %v1031
    %v1033 = vpop.xlane.xlu0 %1032
    %v1034 = vsel %vm357, %v1012, 0.0
    %1035 = vadd.xlane.f32.xlu0 %v1034
    %v1036 = vpop.xlane.xlu0 %1035
    %v1037 = vrcp.pop %v1015
    %v1038 = vrcp.pop %v1018
    %v1039 = vrcp.pop %v1021
    %v1040 = vrcp.pop %v1024
    %v1041 = vrcp.pop %v1027
    %v1042 = vrcp.pop %v1030
    %v1043 = vrcp.pop %v1033
    %v1044 = vrcp.pop %v1036
    %v1045 = vmul.f32 %v998, %v1037
    %v1046 = vmul.f32 %v1000, %v1038
    %v1047 = vmul.f32 %v1002, %v1039
    %v1048 = vmul.f32 %v1004, %v1040
    %v1049 = vmul.f32 %v1006, %v1041
    %v1050 = vmul.f32 %v1008, %v1042
    %v1051 = vmul.f32 %v1010, %v1043
    %v1052 = vmul.f32 %v1012, %v1044
    %v1053 = vpack.c.bf16 %v1045, %v1045
    %v1054 = vpack.c.bf16 %v1046, %v1046
    %v1055 = vpack.c.bf16 %v1047, %v1047
    %v1056 = vpack.c.bf16 %v1048, %v1048
    %v1057 = vpack.c.bf16 %v1049, %v1049
    %v1058 = vpack.c.bf16 %v1050, %v1050
    %v1059 = vpack.c.bf16 %v1051, %v1051
    %v1060 = vpack.c.bf16 %v1052, %v1052
    %v1065 = vunpack.c.l.b16 %v1053
    %v1066 = vunpack.c.l.b16 %v1054
    %v1067 = vunpack.c.l.b16 %v1055
    %v1068 = vunpack.c.l.b16 %v1056
    %v1069 = vpack.c.b16 %v1066, %v1065
    %v1070 = vpack.c.b16 %v1068, %v1067
    %v1072 = vunpack.c.l.b16 %v878
    %v1073 = vpack.c.b16 %v1072, %v1072
    %1074 = vrot.lane.b32.xlu0 %v1073, 64
    %v1075 = vpop.permute.xlu0 %1074
    %v1077 = vsel %vm357, %v1069, 0
    %v1080 = vsel %vm357, %v1070, 0
    %v1083 = vsel %vm475, %v1075, 0
    %1085 = vmatpush.bf16.msra.mxu0 0
    %1086 = vmatpush.bf16.msra.mxu0 0
    %1087 = vmatpush.bf16.msra.mxu0 0
    %1088 = vmatpush.bf16.msra.mxu0 0
    %1089 = vmatpush.bf16.msra.mxu0 0
    %1090 = vmatpush.bf16.msra.mxu0 0
    %1091 = vmatpush.bf16.msra.mxu0 0
    %1092 = vmatpush.bf16.msra.mxu0 %v1083
    %1093 = vmatmul.bf16.gmra.mxu0 %v1077
    %v1094 = vpop.f32.mrf.mxu0
    %v1095 = vadd.f32 0.0, %v1094
    %v1096 = vpop.f32.mrf.mxu0
    %v1097 = vadd.f32 0.0, %v1096
    %1098 = vmatmul.bf16.gmra.mxu0 %v1080
    %v1099 = vpop.f32.mrf.mxu0
    %v1100 = vadd.f32 0.0, %v1099
    %v1101 = vpop.f32.mrf.mxu0
    %v1102 = vadd.f32 0.0, %v1101
    %1103 = vdwg.mxu0
    %v1108 = vunpack.c.l.b16 %v1057
    %v1109 = vunpack.c.l.b16 %v1058
    %v1110 = vunpack.c.l.b16 %v1059
    %v1111 = vunpack.c.l.b16 %v1060
    %v1112 = vpack.c.b16 %v1109, %v1108
    %v1113 = vpack.c.b16 %v1111, %v1110
    %v1115 = vunpack.c.l.b16 %v879
    %v1116 = vpack.c.b16 %v1115, %v1115
    %1117 = vrot.lane.b32.xlu0 %v1116, 64
    %v1118 = vpop.permute.xlu0 %1117
    %v1120 = vsel %vm357, %v1112, 0
    %v1123 = vsel %vm357, %v1113, 0
    %v1126 = vsel %vm475, %v1118, 0
    %1128 = vmatpush.bf16.msra.mxu0 0
    %1129 = vmatpush.bf16.msra.mxu0 0
    %1130 = vmatpush.bf16.msra.mxu0 0
    %1131 = vmatpush.bf16.msra.mxu0 0
    %1132 = vmatpush.bf16.msra.mxu0 0
    %1133 = vmatpush.bf16.msra.mxu0 0
    %1134 = vmatpush.bf16.msra.mxu0 0
    %1135 = vmatpush.bf16.msra.mxu0 %v1126
    %1136 = vmatmul.bf16.gmra.mxu0 %v1120
    %v1137 = vpop.f32.mrf.mxu0
    %v1138 = vadd.f32 0.0, %v1137
    %v1139 = vpop.f32.mrf.mxu0
    %v1140 = vadd.f32 0.0, %v1139
    %1141 = vmatmul.bf16.gmra.mxu0 %v1123
    %v1142 = vpop.f32.mrf.mxu0
    %v1143 = vadd.f32 0.0, %v1142
    %v1144 = vpop.f32.mrf.mxu0
    %v1145 = vadd.f32 0.0, %v1144
    %1146 = vdwg.mxu0
    %v1147 = vmul.f32 %v1095, %v161
    %v1148 = vmul.f32 %v1097, %v162
    %v1149 = vmul.f32 %v1100, %v163
    %v1150 = vmul.f32 %v1102, %v164
    %v1151 = vmul.f32 %v1138, %v161
    %v1152 = vmul.f32 %v1140, %v162
    %v1153 = vmul.f32 %v1143, %v163
    %v1154 = vmul.f32 %v1145, %v164
    %v1155 = vadd.f32 %v1147, %v1148
    %v1156 = vadd.f32 %v1151, %v1152
    %v1157 = vadd.f32 %v1155, %v1149
    %v1158 = vadd.f32 %v1156, %v1153
    %v1159 = vadd.f32 %v1157, %v1150
    %v1160 = vadd.f32 %v1158, %v1154
    %s1161 = scalar_lea.vmem [#allocation11], 16
    %v1162 = vld [vmem:[%s1161] sm:$0xf]
    %v1163 = vld [vmem:[%s1161 + $0x4] sm:$0xf]
    %v1164 = vld [vmem:[%s1161 + $0x8] sm:$0xf]
    %v1165 = vld [vmem:[%s1161 + $0xc] sm:$0xf]
    %v1166 = vpack.c.bf16 %v1160, %v1159
    %v1171 = vunpack.c.l.b16 %v1162
    %v1172 = vunpack.c.l.b16 %v1163
    %v1173 = vunpack.c.l.b16 %v1164
    %v1174 = vunpack.c.l.b16 %v1165
    %v1175 = vpack.c.b16 %v1172, %v1171
    %v1176 = vpack.c.b16 %v1174, %v1173
    %v1180 = vsel %vm168, %v1166, 0
    %1182 = vmatpush.bf16.msra.mxu0 0
    %1183 = vmatpush.bf16.msra.mxu0 0
    %1184 = vmatpush.bf16.msra.mxu0 0
    %1185 = vmatpush.bf16.msra.mxu0 0
    %1186 = vmatpush.bf16.msra.mxu0 0
    %1187 = vmatpush.bf16.msra.mxu0 0
    %1188 = vmatpush.bf16.msra.mxu0 %v1176
    %1189 = vmatpush.bf16.msra.mxu0 %v1175
    %1190 = vmatmul.bf16.gmra.mxu0 %v1180
    %v1191 = vpop.f32.mrf.mxu0
    %v1192 = vadd.f32 0.0, %v1191
    %v1193 = vpop.f32.mrf.mxu0
    %v1194 = vadd.f32 0.0, %v1193
    %1195 = vdwg.mxu0
    %v1196 = vadd.f32 %v784, %v1192
    %v1197 = vadd.f32 %v785, %v1194
    %s1198 = scalar_lea.vmem %s6, 1
    %v1199 = vld [vmem:[%s1198] sm:$0x1]
    %v1200 = vmul.f32 %v1196, %v1196
    %v1201 = vmul.f32 %v1197, %v1197
    %v1202 = vsel %vm168, %v1200, 0.0
    %1203 = vadd.xlane.f32.xlu0 %v1202
    %v1204 = vpop.xlane.xlu0 %1203
    %v1205 = vsel %vm168, %v1201, 0.0
    %1206 = vadd.xlane.f32.xlu0 %v1205
    %v1207 = vpop.xlane.xlu0 %1206
    %v1208 = vmul.f32 %v1204, %v181
    %v1209 = vmul.f32 %v1207, %v181
    %v1210 = vadd.f32 %v1208, 1e-05
    %v1211 = vadd.f32 %v1209, 1e-05
    %v1212 = vrsqrt.pop %v1210
    %v1213 = vmul.f32 %v1212, %v1210
    %v1214 = vmul.f32 %v1213, %v1212
    %v1215 = vmul.f32 0.5, %v1214
    %v1216 = vsub.f32 1.5, %v1215
    %v1217 = vmul.f32 %v1212, %v1216
    %vm1218 = vweird.f32 %v1210
    %vm1219 = vweird.f32 %v1212
    %vm1220 = vmor %vm1218, %vm1219
    %v1221 = vsel %vm1220, %v1212, %v1217
    %v1222 = vrsqrt.pop %v1211
    %v1223 = vmul.f32 %v1222, %v1211
    %v1224 = vmul.f32 %v1223, %v1222
    %v1225 = vmul.f32 0.5, %v1224
    %v1226 = vsub.f32 1.5, %v1225
    %v1227 = vmul.f32 %v1222, %v1226
    %vm1228 = vweird.f32 %v1211
    %vm1229 = vweird.f32 %v1222
    %vm1230 = vmor %vm1228, %vm1229
    %v1231 = vsel %vm1230, %v1222, %v1227
    %v1232 = vmul.f32 %v1196, %v1221
    %v1233 = vmul.f32 %v1197, %v1231
    %v1235 = vperm.slane %v1199, 0
    %v1237 = vmul.f32 %v1232, %v1235
    %v1238 = vmul.f32 %v1233, %v1235
    %s1239 = scalar_lea.vmem %s9, 32
    %v1240 = vld [vmem:[%s1239] sm:$0xff]
    %v1241 = vld [vmem:[%s1239 + $0x8] sm:$0xff]
    %v1242 = vld [vmem:[%s1239 + $0x10] sm:$0xff]
    %v1243 = vld [vmem:[%s1239 + $0x18] sm:$0xff]
    %v1244 = vpack.c.bf16 %v1238, %v1237
    %v1249 = vunpack.c.l.b16 %v1240
    %v1250 = vunpack.c.h.b16 %v1240
    %v1251 = vunpack.c.l.b16 %v1241
    %v1252 = vunpack.c.h.b16 %v1241
    %v1253 = vunpack.c.l.b16 %v1242
    %v1254 = vunpack.c.h.b16 %v1242
    %v1255 = vunpack.c.l.b16 %v1243
    %v1256 = vunpack.c.h.b16 %v1243
    %v1257 = vpack.c.b16 %v1251, %v1249
    %v1258 = vpack.c.b16 %v1252, %v1250
    %v1259 = vpack.c.b16 %v1255, %v1253
    %v1260 = vpack.c.b16 %v1256, %v1254
    %v1266 = vsel %vm168, %v1244, 0
    %1268 = vmatpush.bf16.msra.mxu0 0
    %1269 = vmatpush.bf16.msra.mxu0 0
    %1270 = vmatpush.bf16.msra.mxu0 0
    %1271 = vmatpush.bf16.msra.mxu0 0
    %1272 = vmatpush.bf16.msra.mxu0 0
    %1273 = vmatpush.bf16.msra.mxu0 0
    %1274 = vmatpush.bf16.msra.mxu0 %v1259
    %1275 = vmatpush.bf16.msra.mxu0 %v1257
    %1276 = vmatmul.bf16.gmra.mxu0 %v1266
    %v1277 = vpop.f32.mrf.mxu0
    %v1278 = vadd.f32 0.0, %v1277
    %v1279 = vpop.f32.mrf.mxu0
    %v1280 = vadd.f32 0.0, %v1279
    %1281 = vdwg.mxu0
    %1282 = vmatpush.bf16.msra.mxu0 0
    %1283 = vmatpush.bf16.msra.mxu0 0
    %1284 = vmatpush.bf16.msra.mxu0 0
    %1285 = vmatpush.bf16.msra.mxu0 0
    %1286 = vmatpush.bf16.msra.mxu0 0
    %1287 = vmatpush.bf16.msra.mxu0 0
    %1288 = vmatpush.bf16.msra.mxu0 %v1260
    %1289 = vmatpush.bf16.msra.mxu0 %v1258
    %1290 = vmatmul.bf16.gmra.mxu0 %v1266
    %v1291 = vpop.f32.mrf.mxu0
    %v1292 = vadd.f32 0.0, %v1291
    %v1293 = vpop.f32.mrf.mxu0
    %v1294 = vadd.f32 0.0, %v1293
    %1295 = vdwg.mxu0
    %v1296 = vsub.f32 0.0, %v1278
    %v1297 = vsub.f32 0.0, %v1280
    %v1298 = vmul.f32 %v1296, 1.442695
    %v1299 = vpow.pop %v1298
    %v1300 = vmul.f32 %v1297, 1.442695
    %v1301 = vpow.pop %v1300
    %v1302 = vadd.f32 %v1299, 1.0
    %v1303 = vadd.f32 %v1301, 1.0
    %v1304 = vrcp.pop %v1302
    %v1305 = vrcp.pop %v1303
    %v1306 = vmul.f32 %v1278, %v1304
    %v1307 = vmul.f32 %v1280, %v1305
    %1312 = vrot.lane.b32.xlu0 %v1278, 32
    %v1313 = vpop.permute.xlu0 %1312
    %1314 = vrot.lane.b32.xlu0 %v1292, 32
    %v1315 = vpop.permute.xlu0 %1314
    %1316 = vrot.lane.b32.xlu0 %v1280, 32
    %v1317 = vpop.permute.xlu0 %1316
    %1318 = vrot.lane.b32.xlu0 %v1294, 32
    %v1319 = vpop.permute.xlu0 %1318
    %v1320 = vsel %vm168, %v1313, %v1315
    %v1321 = vsel %vm168, %v1317, %v1319
    %v1324 = vmul.f32 %v1306, %v1320
    %v1325 = vmul.f32 %v1307, %v1321
    %s1326 = scalar_lea.vmem %s10, 48
    %v1327 = vld [vmem:[%s1326] sm:$0xf]
    %v1328 = vld [vmem:[%s1326 + $0x4] sm:$0xf]
    %v1329 = vld [vmem:[%s1326 + $0x8] sm:$0xf]
    %v1330 = vld [vmem:[%s1326 + $0xc] sm:$0xf]
    %v1331 = vld [vmem:[%s1326 + $0x10] sm:$0xf]
    %v1332 = vld [vmem:[%s1326 + $0x14] sm:$0xf]
    %v1333 = vld [vmem:[%s1326 + $0x18] sm:$0xf]
    %v1334 = vld [vmem:[%s1326 + $0x1c] sm:$0xf]
    %v1335 = vld [vmem:[%s1326 + $0x20] sm:$0xf]
    %v1336 = vld [vmem:[%s1326 + $0x24] sm:$0xf]
    %v1337 = vld [vmem:[%s1326 + $0x28] sm:$0xf]
    %v1338 = vld [vmem:[%s1326 + $0x2c] sm:$0xf]
    %v1339 = vpack.c.bf16 %v1325, %v1324
    %v1352 = vunpack.c.l.b16 %v1327
    %v1353 = vunpack.c.l.b16 %v1328
    %v1354 = vunpack.c.l.b16 %v1329
    %v1355 = vunpack.c.l.b16 %v1330
    %v1356 = vunpack.c.l.b16 %v1331
    %v1357 = vunpack.c.l.b16 %v1332
    %v1358 = vunpack.c.l.b16 %v1333
    %v1359 = vunpack.c.l.b16 %v1334
    %v1360 = vunpack.c.l.b16 %v1335
    %v1361 = vunpack.c.l.b16 %v1336
    %v1362 = vunpack.c.l.b16 %v1337
    %v1363 = vunpack.c.l.b16 %v1338
    %v1364 = vpack.c.b16 %v1353, %v1352
    %v1365 = vpack.c.b16 %v1355, %v1354
    %v1366 = vpack.c.b16 %v1357, %v1356
    %v1367 = vpack.c.b16 %v1359, %v1358
    %v1368 = vpack.c.b16 %v1361, %v1360
    %v1369 = vpack.c.b16 %v1363, %v1362
    %v1377 = vsel %vm766, %v1339, 0
    %1379 = vmatpush.bf16.msra.mxu0 0
    %1380 = vmatpush.bf16.msra.mxu0 0
    %1381 = vmatpush.bf16.msra.mxu0 %v1369
    %1382 = vmatpush.bf16.msra.mxu0 %v1368
    %1383 = vmatpush.bf16.msra.mxu0 %v1367
    %1384 = vmatpush.bf16.msra.mxu0 %v1366
    %1385 = vmatpush.bf16.msra.mxu0 %v1365
    %1386 = vmatpush.bf16.msra.mxu0 %v1364
    %1387 = vmatmul.bf16.gmra.mxu0 %v1377
    %v1388 = vpop.f32.mrf.mxu0
    %v1389 = vadd.f32 0.0, %v1388
    %v1390 = vpop.f32.mrf.mxu0
    %v1391 = vadd.f32 0.0, %v1390
    %1392 = vdwg.mxu0
    %v1393 = vadd.f32 %v1196, %v1389
    %v1394 = vadd.f32 %v1197, %v1391
    %v1395 = vld [vmem:[%s11] sm:$0x1]
    %v1396 = vmul.f32 %v1393, %v1393
    %v1397 = vmul.f32 %v1394, %v1394
    %v1398 = vsel %vm168, %v1396, 0.0
    %1399 = vadd.xlane.f32.xlu0 %v1398
    %v1400 = vpop.xlane.xlu0 %1399
    %v1401 = vsel %vm168, %v1397, 0.0
    %1402 = vadd.xlane.f32.xlu0 %v1401
    %v1403 = vpop.xlane.xlu0 %1402
    %v1404 = vmul.f32 %v1400, %v181
    %v1405 = vmul.f32 %v1403, %v181
    %v1406 = vadd.f32 %v1404, 1e-05
    %v1407 = vadd.f32 %v1405, 1e-05
    %v1408 = vrsqrt.pop %v1406
    %v1409 = vmul.f32 %v1408, %v1406
    %v1410 = vmul.f32 %v1409, %v1408
    %v1411 = vmul.f32 0.5, %v1410
    %v1412 = vsub.f32 1.5, %v1411
    %v1413 = vmul.f32 %v1408, %v1412
    %vm1414 = vweird.f32 %v1406
    %vm1415 = vweird.f32 %v1408
    %vm1416 = vmor %vm1414, %vm1415
    %v1417 = vsel %vm1416, %v1408, %v1413
    %v1418 = vrsqrt.pop %v1407
    %v1419 = vmul.f32 %v1418, %v1407
    %v1420 = vmul.f32 %v1419, %v1418
    %v1421 = vmul.f32 0.5, %v1420
    %v1422 = vsub.f32 1.5, %v1421
    %v1423 = vmul.f32 %v1418, %v1422
    %vm1424 = vweird.f32 %v1407
    %vm1425 = vweird.f32 %v1418
    %vm1426 = vmor %vm1424, %vm1425
    %v1427 = vsel %vm1426, %v1418, %v1423
    %v1428 = vmul.f32 %v1393, %v1417
    %v1429 = vmul.f32 %v1394, %v1427
    %v1431 = vperm.slane %v1395, 0
    %v1433 = vmul.f32 %v1428, %v1431
    %v1434 = vmul.f32 %v1429, %v1431
    %v1435 = vld [vmem:[#allocation13] sm:$0xf]
    %v1436 = vld [vmem:[#allocation13 + $0x4] sm:$0xf]
    %v1437 = vld [vmem:[#allocation13 + $0x8] sm:$0xf]
    %v1438 = vld [vmem:[#allocation13 + $0xc] sm:$0xf]
    %v1439 = vpack.c.bf16 %v1434, %v1433
    %v1444 = vunpack.c.l.b16 %v1435
    %v1445 = vunpack.c.l.b16 %v1436
    %v1446 = vunpack.c.l.b16 %v1437
    %v1447 = vunpack.c.l.b16 %v1438
    %v1448 = vpack.c.b16 %v1445, %v1444
    %v1449 = vpack.c.b16 %v1447, %v1446
    %v1453 = vsel %vm168, %v1439, 0
    %1455 = vmatpush.bf16.msra.mxu0 0
    %1456 = vmatpush.bf16.msra.mxu0 0
    %1457 = vmatpush.bf16.msra.mxu0 0
    %1458 = vmatpush.bf16.msra.mxu0 0
    %1459 = vmatpush.bf16.msra.mxu0 0
    %1460 = vmatpush.bf16.msra.mxu0 0
    %1461 = vmatpush.bf16.msra.mxu0 %v1449
    %1462 = vmatpush.bf16.msra.mxu0 %v1448
    %1463 = vmatmul.bf16.gmra.mxu0 %v1453
    %v1464 = vpop.f32.mrf.mxu0
    %v1465 = vadd.f32 0.0, %v1464
    %v1466 = vpop.f32.mrf.mxu0
    %v1467 = vadd.f32 0.0, %v1466
    %1468 = vdwg.mxu0
    %vm1469 = vcmask 523264
    %1470 = vst.msk [vmem:[#allocation14] sm:$0xff] %vm1469, %v1465
    %1471 = vst.msk [vmem:[#allocation14 + $0x8] sm:$0xff] %vm1469, %v1467
    // Predicated region
    $region82: #{tpu_custom_call.1} parent=1 // pred_check
      _
    $region83: #{tpu_custom_call.1} parent=1 // pred_check_branch
      %1473 = sbr.rel (0) target = $region85
    $region84: #{tpu_custom_call.1} parent=1 // pred_region
      %1475 = vsyncadd [#allocation4], 0
      %s1476 = sshll.u32 [#allocation14], 4
      %s1477 = int_to_ptr.vmem [resolvable:$true] %s1476
      %s1478 = sshll.u32 %s13, 4
      %s1479 = int_to_ptr.hbm [resolvable:$true] %s1478
      %1484 = dma.vmem_to_hbm [thread:$0]  %s1477, 256, %s1479, [#allocation4], 128, 128, 8
    $region85: #{tpu_custom_call.1} parent=1 // pred_fallthru
      _
    // Predicated region
    $region86: #{tpu_custom_call.1} parent=1 // pred_check
      _
    $region87: #{tpu_custom_call.1} parent=1 // pred_check_branch
      %1486 = sbr.rel (0) target = $region89
    $region88: #{tpu_custom_call.1} parent=1 // pred_region
      %1488 = dma.done [#allocation4], 256
    $region89: #{tpu_custom_call.1} parent=1 // pred_fallthru
      _
    %1489 = vsyncpa [#allocation3], 1
    %1490 = vsyncpa [#allocation6], 1
    %1491 = vsyncpa [#allocation9], 1
    %1492 = vsyncpa [#allocation12], 1
    %1493 = vsyncpa [#allocation4], 1

</llo_original>
